<compile_context>
chip_gen: v7x
topology: tpu7x:2x2x1
jax: 0.10.0
libtpu: 0.0.40
codegen_flags: <defaults>
</compile_context>

<pallas_src>
import jax
import jax.numpy as jnp
from jax.experimental import pallas as pl
from jax.experimental.pallas import tpu as pltpu


# ------------------------------ Pallas kernel -------------------------------

def _mm_bias_kernel(a_ref, b_ref, bias_ref, o_ref):
    # bf16 x bf16 -> f32 accumulation on the MXU; bias add / store in f32.
    o_ref[...] = (
        jnp.dot(a_ref[...], b_ref[...], preferred_element_type=jnp.float32)
        + bias_ref[...]
    )


def _round_up(v, m):
    return ((v + m - 1) // m) * m


def matmul_bias(a, b, bias, *, m_blocks=2):
    """(M,K) @ (K,N) + bias[N]; bf16 MXU inputs, f32 accumulate/output.

    Full K and full N per block (single shot, no K reduction loop); M is split
    into `m_blocks` "parallel" blocks (megacore / v7x dual-TC sharding).
    """
    M, K = a.shape
    K2, N = b.shape
    assert K == K2
    tm = _round_up(pl.cdiv(M, m_blocks), 8)
    Mp = tm * m_blocks
    a_p = jnp.pad(a, ((0, Mp - M), (0, 0))).astype(jnp.bfloat16)
    b_bf = b.astype(jnp.bfloat16)
    bias2d = bias.astype(jnp.float32).reshape(1, N)

    out = pl.pallas_call(
        _mm_bias_kernel,
        out_shape=jax.ShapeDtypeStruct((Mp, N), jnp.float32),
        grid_spec=pltpu.PrefetchScalarGridSpec(
            num_scalar_prefetch=0,
            grid=(m_blocks,),
            in_specs=[
                pl.BlockSpec((tm, K), lambda i: (i, 0)),
                pl.BlockSpec((K, N), lambda i: (0, 0)),
                pl.BlockSpec((1, N), lambda i: (0, 0)),
            ],
            out_specs=pl.BlockSpec((tm, N), lambda i: (i, 0)),
        ),
        compiler_params=pltpu.CompilerParams(
            dimension_semantics=("parallel",)),
    )(a_p, b_bf, bias2d)
    return out[:M]


# --------------------------- transposed conv layer ---------------------------

def conv_transpose2d(x_nhwc, w_torch, bias, stride):
    """nn.ConvTranspose2d (padding=0) via sub-pixel (phase) decomposition.

    w_torch has PyTorch layout (Cin, Cout, KH, KW); requires KH % stride == 0
    (true for all three decoder layers).  stride=1 degenerates to the standard
    pad + flip + valid-conv lowering.
    """
    Cin, Cout, KH, KW = w_torch.shape
    N, H, W, _ = x_nhwc.shape
    s = stride
    assert KH == KW and KH % s == 0
    kk = KH // s                             # sub-kernel extent per phase
    Qh, Qw = H + kk - 1, W + kk - 1          # per-phase output extent
    OH, OW = Qh * s, Qw * s                  # == (H-1)*s + KH

    # Phase-independent patch matrix: kk*kk shifted views of the halo-padded,
    # UN-dilated input -> (N*Qh*Qw, kk*kk*Cin).  (A few hundred KB at most.)
    xp = jnp.pad(x_nhwc, ((0, 0), (kk - 1, kk - 1), (kk - 1, kk - 1), (0, 0)))
    taps = [xp[:, m:m + Qh, n:n + Qw, :] for m in range(kk) for n in range(kk)]
    patches = jnp.concatenate(taps, axis=-1).reshape(N * Qh * Qw, kk * kk * Cin)

    # Pack weights: rows ordered (m', n', ci) with the sub-tap index flipped;
    # cols ordered (p_h, p_w, co) = all s*s output phases on the lane dim.
    # Original kernel index decomposes as kh = m*s + p_h.
    w_r = w_torch.reshape(Cin, Cout, kk, s, kk, s)
    w_f = w_r[:, :, ::-1, :, ::-1, :]                      # flip sub-tap index
    w2d = jnp.transpose(w_f, (2, 4, 0, 3, 5, 1)).reshape(kk * kk * Cin,
                                                         s * s * Cout)
    b2d = jnp.tile(bias, s * s)

    y2d = matmul_bias(patches, w2d, b2d)                   # (N*Qh*Qw, s*s*Cout)

    # Interleave the s*s phases back into the spatial grid.
    y = y2d.reshape(N, Qh, Qw, s, s, Cout)
    y = jnp.transpose(y, (0, 1, 3, 2, 4, 5)).reshape(N, OH, OW, Cout)
    return y


def decoder_forward(x_nchw, params):
    # NCHW at the interface (PyTorch convention), NHWC inside.
    x = jnp.transpose(x_nchw, (0, 2, 3, 1))
    x = conv_transpose2d(x, params["w1"], params["b1"], 1)
    x = conv_transpose2d(x, params["w2"], params["b2"], 2)
    x = conv_transpose2d(x, params["w3"], params["b3"], 4)
    pre = jnp.transpose(x, (0, 3, 1, 2))                   # NCHW, pre-softmax
    C = pre.shape[1]
    if C == 1:
        # Softmax2d normalizes across channels; with a single channel the
        # result is exactly 1.0 everywhere -- no kernel launch needed.
        out = jnp.ones_like(pre)
    else:
        out = jax.nn.softmax(pre, axis=1)
    return out, pre


# ------------------------------ pure-JAX reference ---------------------------

def conv_transpose2d_ref(x_nhwc, w_torch, bias, stride):
    """Direct scatter-form of PyTorch ConvTranspose2d (padding=0)."""
    N, H, W, Ci = x_nhwc.shape
    _, Co, KH, KW = w_torch.shape
    s = stride
    OH = (H - 1) * s + KH
    OW = (W - 1) * s + KW
    y = jnp.zeros((N, OH, OW, Co), jnp.float32)
    for ih in range(H):
        for iw in range(W):
            c = jnp.einsum("nc,cokl->nklo", x_nhwc[:, ih, iw, :], w_torch,
                           precision=jax.lax.Precision.HIGHEST)
            y = y.at[:, ih * s:ih * s + KH, iw * s:iw * s + KW, :].add(c)
    return y + bias


def decoder_ref(x_nchw, params):
    x = jnp.transpose(x_nchw, (0, 2, 3, 1))
    x = conv_transpose2d_ref(x, params["w1"], params["b1"], 1)
    x = conv_transpose2d_ref(x, params["w2"], params["b2"], 2)
    x = conv_transpose2d_ref(x, params["w3"], params["b3"], 4)
    pre = jnp.transpose(x, (0, 3, 1, 2))
    return jax.nn.softmax(pre, axis=1), pre


# ------------------------------------ main -----------------------------------

if __name__ == "__main__":
    key = jax.random.PRNGKey(0)
    ks = jax.random.split(key, 7)

    N, Cin, H, W = 2, 64, 4, 4            # input implied by ConvTranspose2d(64, ...)
    x = jax.random.normal(ks[0], (N, Cin, H, W), jnp.float32)

    # Deterministic synthetic parameters (PyTorch ConvTranspose2d weight layout:
    # (in_channels, out_channels, kH, kW); bias: (out_channels,)).
    params = {
        "w1": jax.random.normal(ks[1], (64, 64, 3, 3), jnp.float32) / (64 * 9) ** 0.5,
        "b1": jax.random.normal(ks[2], (64,), jnp.float32) * 0.1,
        "w2": jax.random.normal(ks[3], (64, 32, 4, 4), jnp.float32) / (64 * 16) ** 0.5,
        "b2": jax.random.normal(ks[4], (32,), jnp.float32) * 0.1,
        "w3": jax.random.normal(ks[5], (32, 1, 8, 8), jnp.float32) / (32 * 64) ** 0.5,
        "b3": jax.random.normal(ks[6], (1,), jnp.float32) * 0.1,
    }

    out, pre = jax.jit(decoder_forward)(x, params)
    jax.block_until_ready((out, pre))

    # expected output spatial size: 4 -> 6 -> 14 -> 60
    assert out.shape == (2, 1, 60, 60), out.shape

    ref_out, ref_pre = jax.jit(decoder_ref)(x, params)
    jax.block_until_ready((ref_out, ref_pre))

    assert jnp.allclose(pre, ref_pre, rtol=2e-2, atol=2e-2), "conv stack mismatch"
    assert jnp.allclose(out, ref_out, rtol=1e-3, atol=1e-3), "softmax mismatch"

    print("KERNEL_OK")
</pallas_src>

<mosaic_0001>
module attributes {stable_mosaic.version = 11 : i64} {
  func.func @_mm_bias_kernel(%arg0: i32, %arg1: memref<40x576xbf16, #tpu.memory_space<vmem>>, %arg2: memref<576x64xbf16, #tpu.memory_space<vmem>>, %arg3: memref<1x64xf32, #tpu.memory_space<vmem>>, %arg4: memref<40x64xf32, #tpu.memory_space<vmem>>) attributes {dimension_semantics = [#tpu.dimension_semantics<parallel>], iteration_bounds = array<i64: 2>, scalar_prefetch = 0 : i64, scratch_operands = 0 : i64, tpu.core_type = #tpu.core_type<tc>, window_params = [{transform_indices = @transform_0, window_bounds = array<i64: 40, 576>}, {pipeline_mode = #tpu.pipeline_mode<synchronous>, transform_indices = @transform_1, window_bounds = array<i64: 576, 64>}, {pipeline_mode = #tpu.pipeline_mode<synchronous>, transform_indices = @transform_2, window_bounds = array<i64: 1, 64>}, {transform_indices = @transform_3, window_bounds = array<i64: 40, 64>}]} {
    %c0 = arith.constant 0 : index
    %c0_0 = arith.constant 0 : index
    %0 = vector.load %arg1[%c0, %c0_0] : memref<40x576xbf16, #tpu.memory_space<vmem>>, vector<40x576xbf16>
    %c0_1 = arith.constant 0 : index
    %c0_2 = arith.constant 0 : index
    %1 = vector.load %arg2[%c0_1, %c0_2] : memref<576x64xbf16, #tpu.memory_space<vmem>>, vector<576x64xbf16>
    %cst = arith.constant dense<0.000000e+00> : vector<40x64xf32>
    %2 = tpu.matmul %0, %1, %cst {dimension_numbers = #tpu.dot_dimension_numbers<[1], [0], [0], [1], [0, 0, 1, 1], [], []>} : vector<40x576xbf16>, vector<576x64xbf16>, vector<40x64xf32> -> vector<40x64xf32>
    %c0_3 = arith.constant 0 : index
    %c0_4 = arith.constant 0 : index
    %3 = vector.load %arg3[%c0_3, %c0_4] : memref<1x64xf32, #tpu.memory_space<vmem>>, vector<1x64xf32>
    %4 = vector.broadcast %3 : vector<1x64xf32> to vector<40x64xf32>
    %5 = arith.addf %2, %4 : vector<40x64xf32>
    %c0_5 = arith.constant 0 : index
    %c0_6 = arith.constant 0 : index
    %6 = vector.load %arg4[%c0_5, %c0_6] : memref<40x64xf32, #tpu.memory_space<vmem>>, vector<40x64xf32>
    tpu.vector_store %arg4[%c0_5, %c0_6], %5 {strides = array<i32>} : memref<40x64xf32, #tpu.memory_space<vmem>>, vector<40x64xf32>,
    return
  }
  func.func @transform_0(%arg0: i32) -> (i32, i32) {
    %c0_i32 = arith.constant 0 : i32
    %c0_i32_0 = arith.constant 0 : i32
    return %arg0, %c0_i32 : i32, i32
  }
  func.func @transform_1(%arg0: i32) -> (i32, i32) {
    %c0_i32 = arith.constant 0 : i32
    %c0_i32_0 = arith.constant 0 : i32
    %c0_i32_1 = arith.constant 0 : i32
    return %c0_i32, %c0_i32_0 : i32, i32
  }
  func.func @transform_2(%arg0: i32) -> (i32, i32) {
    %c0_i32 = arith.constant 0 : i32
    %c0_i32_0 = arith.constant 0 : i32
    %c0_i32_1 = arith.constant 0 : i32
    return %c0_i32, %c0_i32_0 : i32, i32
  }
  func.func @transform_3(%arg0: i32) -> (i32, i32) {
    %c0_i32 = arith.constant 0 : i32
    %c0_i32_0 = arith.constant 0 : i32
    return %arg0, %c0_i32 : i32, i32
  }
}

module attributes {stable_mosaic.version = 11 : i64} {
  func.func @_mm_bias_kernel(%arg0: i32, %arg1: memref<56x256xbf16, #tpu.memory_space<vmem>>, %arg2: memref<256x128xbf16, #tpu.memory_space<vmem>>, %arg3: memref<1x128xf32, #tpu.memory_space<vmem>>, %arg4: memref<56x128xf32, #tpu.memory_space<vmem>>) attributes {dimension_semantics = [#tpu.dimension_semantics<parallel>], iteration_bounds = array<i64: 2>, scalar_prefetch = 0 : i64, scratch_operands = 0 : i64, tpu.core_type = #tpu.core_type<tc>, window_params = [{transform_indices = @transform_0, window_bounds = array<i64: 56, 256>}, {pipeline_mode = #tpu.pipeline_mode<synchronous>, transform_indices = @transform_1, window_bounds = array<i64: 256, 128>}, {pipeline_mode = #tpu.pipeline_mode<synchronous>, transform_indices = @transform_2, window_bounds = array<i64: 1, 128>}, {transform_indices = @transform_3, window_bounds = array<i64: 56, 128>}]} {
    %c0 = arith.constant 0 : index
    %c0_0 = arith.constant 0 : index
    %0 = vector.load %arg1[%c0, %c0_0] : memref<56x256xbf16, #tpu.memory_space<vmem>>, vector<56x256xbf16>
    %c0_1 = arith.constant 0 : index
    %c0_2 = arith.constant 0 : index
    %1 = vector.load %arg2[%c0_1, %c0_2] : memref<256x128xbf16, #tpu.memory_space<vmem>>, vector<256x128xbf16>
    %cst = arith.constant dense<0.000000e+00> : vector<56x128xf32>
    %2 = tpu.matmul %0, %1, %cst {dimension_numbers = #tpu.dot_dimension_numbers<[1], [0], [0], [1], [0, 0, 1, 1], [], []>} : vector<56x256xbf16>, vector<256x128xbf16>, vector<56x128xf32> -> vector<56x128xf32>
    %c0_3 = arith.constant 0 : index
    %c0_4 = arith.constant 0 : index
    %3 = vector.load %arg3[%c0_3, %c0_4] : memref<1x128xf32, #tpu.memory_space<vmem>>, vector<1x128xf32>
    %4 = vector.broadcast %3 : vector<1x128xf32> to vector<56x128xf32>
    %5 = arith.addf %2, %4 : vector<56x128xf32>
    %c0_5 = arith.constant 0 : index
    %c0_6 = arith.constant 0 : index
    %6 = vector.load %arg4[%c0_5, %c0_6] : memref<56x128xf32, #tpu.memory_space<vmem>>, vector<56x128xf32>
    tpu.vector_store %arg4[%c0_5, %c0_6], %5 {strides = array<i32>} : memref<56x128xf32, #tpu.memory_space<vmem>>, vector<56x128xf32>,
    return
  }
  func.func @transform_0(%arg0: i32) -> (i32, i32) {
    %c0_i32 = arith.constant 0 : i32
    %c0_i32_0 = arith.constant 0 : i32
    return %arg0, %c0_i32 : i32, i32
  }
  func.func @transform_1(%arg0: i32) -> (i32, i32) {
    %c0_i32 = arith.constant 0 : i32
    %c0_i32_0 = arith.constant 0 : i32
    %c0_i32_1 = arith.constant 0 : i32
    return %c0_i32, %c0_i32_0 : i32, i32
  }
  func.func @transform_2(%arg0: i32) -> (i32, i32) {
    %c0_i32 = arith.constant 0 : i32
    %c0_i32_0 = arith.constant 0 : i32
    %c0_i32_1 = arith.constant 0 : i32
    return %c0_i32, %c0_i32_0 : i32, i32
  }
  func.func @transform_3(%arg0: i32) -> (i32, i32) {
    %c0_i32 = arith.constant 0 : i32
    %c0_i32_0 = arith.constant 0 : i32
    return %arg0, %c0_i32 : i32, i32
  }
}

module attributes {stable_mosaic.version = 11 : i64} {
  func.func @_mm_bias_kernel(%arg0: i32, %arg1: memref<232x128xbf16, #tpu.memory_space<vmem>>, %arg2: memref<128x16xbf16, #tpu.memory_space<vmem>>, %arg3: memref<1x16xf32, #tpu.memory_space<vmem>>, %arg4: memref<232x16xf32, #tpu.memory_space<vmem>>) attributes {dimension_semantics = [#tpu.dimension_semantics<parallel>], iteration_bounds = array<i64: 2>, scalar_prefetch = 0 : i64, scratch_operands = 0 : i64, tpu.core_type = #tpu.core_type<tc>, window_params = [{transform_indices = @transform_0, window_bounds = array<i64: 232, 128>}, {pipeline_mode = #tpu.pipeline_mode<synchronous>, transform_indices = @transform_1, window_bounds = array<i64: 128, 16>}, {pipeline_mode = #tpu.pipeline_mode<synchronous>, transform_indices = @transform_2, window_bounds = array<i64: 1, 16>}, {transform_indices = @transform_3, window_bounds = array<i64: 232, 16>}]} {
    %c0 = arith.constant 0 : index
    %c0_0 = arith.constant 0 : index
    %0 = vector.load %arg1[%c0, %c0_0] : memref<232x128xbf16, #tpu.memory_space<vmem>>, vector<232x128xbf16>
    %c0_1 = arith.constant 0 : index
    %c0_2 = arith.constant 0 : index
    %1 = vector.load %arg2[%c0_1, %c0_2] : memref<128x16xbf16, #tpu.memory_space<vmem>>, vector<128x16xbf16>
    %cst = arith.constant dense<0.000000e+00> : vector<232x16xf32>
    %2 = tpu.matmul %0, %1, %cst {dimension_numbers = #tpu.dot_dimension_numbers<[1], [0], [0], [1], [0, 0, 1, 1], [], []>} : vector<232x128xbf16>, vector<128x16xbf16>, vector<232x16xf32> -> vector<232x16xf32>
    %c0_3 = arith.constant 0 : index
    %c0_4 = arith.constant 0 : index
    %3 = vector.load %arg3[%c0_3, %c0_4] : memref<1x16xf32, #tpu.memory_space<vmem>>, vector<1x16xf32>
    %4 = vector.broadcast %3 : vector<1x16xf32> to vector<232x16xf32>
    %5 = arith.addf %2, %4 : vector<232x16xf32>
    %c0_5 = arith.constant 0 : index
    %c0_6 = arith.constant 0 : index
    %6 = vector.load %arg4[%c0_5, %c0_6] : memref<232x16xf32, #tpu.memory_space<vmem>>, vector<232x16xf32>
    tpu.vector_store %arg4[%c0_5, %c0_6], %5 {strides = array<i32>} : memref<232x16xf32, #tpu.memory_space<vmem>>, vector<232x16xf32>,
    return
  }
  func.func @transform_0(%arg0: i32) -> (i32, i32) {
    %c0_i32 = arith.constant 0 : i32
    %c0_i32_0 = arith.constant 0 : i32
    return %arg0, %c0_i32 : i32, i32
  }
  func.func @transform_1(%arg0: i32) -> (i32, i32) {
    %c0_i32 = arith.constant 0 : i32
    %c0_i32_0 = arith.constant 0 : i32
    %c0_i32_1 = arith.constant 0 : i32
    return %c0_i32, %c0_i32_0 : i32, i32
  }
  func.func @transform_2(%arg0: i32) -> (i32, i32) {
    %c0_i32 = arith.constant 0 : i32
    %c0_i32_0 = arith.constant 0 : i32
    %c0_i32_1 = arith.constant 0 : i32
    return %c0_i32, %c0_i32_0 : i32, i32
  }
  func.func @transform_3(%arg0: i32) -> (i32, i32) {
    %c0_i32 = arith.constant 0 : i32
    %c0_i32_0 = arith.constant 0 : i32
    return %arg0, %c0_i32 : i32, i32
  }
}

</mosaic_0001>

<llo_original>
// kernel: reverse.2
$region0: #{reverse.2}
  #allocation0 [shape = 's32[1]{0}', space=sflag, size = 0x4, scoped, tag = 'scoped memory for reverse.2']
  %s0 = inlined_call_operand.vmem [shape: f32[64,64,3,3], index: 0, kind: input, shape index: {}]
  %s1 = inlined_call_operand.vmem [shape: bf16[64,64,3,3], index: 1, kind: output, shape index: {}]
  %s2 = scalar_lea.vmem %s0, 512
  %v3 = vld [vmem:[%s2] sm:$0xff]
  %v4 = vpack.c.bf16 0.0, %v3
  %5 = vst [vmem:[%s1] sm:$0xf] %v4
  %s6 = scalar_lea.vmem %s0, 320
  %v7 = vld [vmem:[%s6] sm:$0xff]
  %s8 = scalar_lea.vmem %s1, 96
  %v9 = vpack.c.bf16 0.0, %v7
  %10 = vst [vmem:[%s8] sm:$0xf] %v9
  %s11 = scalar_lea.vmem %s0, 128
  %v12 = vld [vmem:[%s11] sm:$0xff]
  %s13 = scalar_lea.vmem %s1, 192
  %v14 = vpack.c.bf16 0.0, %v12
  %15 = vst [vmem:[%s13] sm:$0xf] %v14
  %s16 = scalar_lea.vmem %s0, 448
  %v17 = vld [vmem:[%s16] sm:$0xff]
  %s18 = scalar_lea.vmem %s1, 32
  %v19 = vpack.c.bf16 0.0, %v17
  %20 = vst [vmem:[%s18] sm:$0xf] %v19
  %s21 = scalar_lea.vmem %s0, 256
  %v22 = vld [vmem:[%s21] sm:$0xff]
  %s23 = scalar_lea.vmem %s1, 128
  %v24 = vpack.c.bf16 0.0, %v22
  %25 = vst [vmem:[%s23] sm:$0xf] %v24
  %s26 = scalar_lea.vmem %s0, 64
  %v27 = vld [vmem:[%s26] sm:$0xff]
  %s28 = scalar_lea.vmem %s1, 224
  %v29 = vpack.c.bf16 0.0, %v27
  %30 = vst [vmem:[%s28] sm:$0xf] %v29
  %s31 = scalar_lea.vmem %s0, 384
  %v32 = vld [vmem:[%s31] sm:$0xff]
  %s33 = scalar_lea.vmem %s1, 64
  %v34 = vpack.c.bf16 0.0, %v32
  %35 = vst [vmem:[%s33] sm:$0xf] %v34
  %s36 = scalar_lea.vmem %s0, 192
  %v37 = vld [vmem:[%s36] sm:$0xff]
  %s38 = scalar_lea.vmem %s1, 160
  %v39 = vpack.c.bf16 0.0, %v37
  %40 = vst [vmem:[%s38] sm:$0xf] %v39
  %v41 = vld [vmem:[%s0] sm:$0xff]
  %s42 = scalar_lea.vmem %s1, 256
  %v43 = vpack.c.bf16 0.0, %v41
  %44 = vst [vmem:[%s42] sm:$0xf] %v43
  %s45 = scalar_lea.vmem %s0, 520
  %v46 = vld [vmem:[%s45] sm:$0xff]
  %s47 = scalar_lea.vmem %s1, 4
  %v48 = vpack.c.bf16 0.0, %v46
  %49 = vst [vmem:[%s47] sm:$0xf] %v48
  %s50 = scalar_lea.vmem %s0, 328
  %v51 = vld [vmem:[%s50] sm:$0xff]
  %s52 = scalar_lea.vmem %s1, 100
  %v53 = vpack.c.bf16 0.0, %v51
  %54 = vst [vmem:[%s52] sm:$0xf] %v53
  %s55 = scalar_lea.vmem %s0, 136
  %v56 = vld [vmem:[%s55] sm:$0xff]
  %s57 = scalar_lea.vmem %s1, 196
  %v58 = vpack.c.bf16 0.0, %v56
  %59 = vst [vmem:[%s57] sm:$0xf] %v58
  %s60 = scalar_lea.vmem %s0, 456
  %v61 = vld [vmem:[%s60] sm:$0xff]
  %s62 = scalar_lea.vmem %s1, 36
  %v63 = vpack.c.bf16 0.0, %v61
  %64 = vst [vmem:[%s62] sm:$0xf] %v63
  %s65 = scalar_lea.vmem %s0, 264
  %v66 = vld [vmem:[%s65] sm:$0xff]
  %s67 = scalar_lea.vmem %s1, 132
  %v68 = vpack.c.bf16 0.0, %v66
  %69 = vst [vmem:[%s67] sm:$0xf] %v68
  %s70 = scalar_lea.vmem %s0, 72
  %v71 = vld [vmem:[%s70] sm:$0xff]
  %s72 = scalar_lea.vmem %s1, 228
  %v73 = vpack.c.bf16 0.0, %v71
  %74 = vst [vmem:[%s72] sm:$0xf] %v73
  %s75 = scalar_lea.vmem %s0, 392
  %v76 = vld [vmem:[%s75] sm:$0xff]
  %s77 = scalar_lea.vmem %s1, 68
  %v78 = vpack.c.bf16 0.0, %v76
  %79 = vst [vmem:[%s77] sm:$0xf] %v78
  %s80 = scalar_lea.vmem %s0, 200
  %v81 = vld [vmem:[%s80] sm:$0xff]
  %s82 = scalar_lea.vmem %s1, 164
  %v83 = vpack.c.bf16 0.0, %v81
  %84 = vst [vmem:[%s82] sm:$0xf] %v83
  %s85 = scalar_lea.vmem %s0, 8
  %v86 = vld [vmem:[%s85] sm:$0xff]
  %s87 = scalar_lea.vmem %s1, 260
  %v88 = vpack.c.bf16 0.0, %v86
  %89 = vst [vmem:[%s87] sm:$0xf] %v88
  %s90 = scalar_lea.vmem %s0, 528
  %v91 = vld [vmem:[%s90] sm:$0xff]
  %s92 = scalar_lea.vmem %s1, 8
  %v93 = vpack.c.bf16 0.0, %v91
  %94 = vst [vmem:[%s92] sm:$0xf] %v93
  %s95 = scalar_lea.vmem %s0, 336
  %v96 = vld [vmem:[%s95] sm:$0xff]
  %s97 = scalar_lea.vmem %s1, 104
  %v98 = vpack.c.bf16 0.0, %v96
  %99 = vst [vmem:[%s97] sm:$0xf] %v98
  %s100 = scalar_lea.vmem %s0, 144
  %v101 = vld [vmem:[%s100] sm:$0xff]
  %s102 = scalar_lea.vmem %s1, 200
  %v103 = vpack.c.bf16 0.0, %v101
  %104 = vst [vmem:[%s102] sm:$0xf] %v103
  %s105 = scalar_lea.vmem %s0, 464
  %v106 = vld [vmem:[%s105] sm:$0xff]
  %s107 = scalar_lea.vmem %s1, 40
  %v108 = vpack.c.bf16 0.0, %v106
  %109 = vst [vmem:[%s107] sm:$0xf] %v108
  %s110 = scalar_lea.vmem %s0, 272
  %v111 = vld [vmem:[%s110] sm:$0xff]
  %s112 = scalar_lea.vmem %s1, 136
  %v113 = vpack.c.bf16 0.0, %v111
  %114 = vst [vmem:[%s112] sm:$0xf] %v113
  %s115 = scalar_lea.vmem %s0, 80
  %v116 = vld [vmem:[%s115] sm:$0xff]
  %s117 = scalar_lea.vmem %s1, 232
  %v118 = vpack.c.bf16 0.0, %v116
  %119 = vst [vmem:[%s117] sm:$0xf] %v118
  %s120 = scalar_lea.vmem %s0, 400
  %v121 = vld [vmem:[%s120] sm:$0xff]
  %s122 = scalar_lea.vmem %s1, 72
  %v123 = vpack.c.bf16 0.0, %v121
  %124 = vst [vmem:[%s122] sm:$0xf] %v123
  %s125 = scalar_lea.vmem %s0, 208
  %v126 = vld [vmem:[%s125] sm:$0xff]
  %s127 = scalar_lea.vmem %s1, 168
  %v128 = vpack.c.bf16 0.0, %v126
  %129 = vst [vmem:[%s127] sm:$0xf] %v128
  %s130 = scalar_lea.vmem %s0, 16
  %v131 = vld [vmem:[%s130] sm:$0xff]
  %s132 = scalar_lea.vmem %s1, 264
  %v133 = vpack.c.bf16 0.0, %v131
  %134 = vst [vmem:[%s132] sm:$0xf] %v133
  %s135 = scalar_lea.vmem %s0, 536
  %v136 = vld [vmem:[%s135] sm:$0xff]
  %s137 = scalar_lea.vmem %s1, 12
  %v138 = vpack.c.bf16 0.0, %v136
  %139 = vst [vmem:[%s137] sm:$0xf] %v138
  %s140 = scalar_lea.vmem %s0, 344
  %v141 = vld [vmem:[%s140] sm:$0xff]
  %s142 = scalar_lea.vmem %s1, 108
  %v143 = vpack.c.bf16 0.0, %v141
  %144 = vst [vmem:[%s142] sm:$0xf] %v143
  %s145 = scalar_lea.vmem %s0, 152
  %v146 = vld [vmem:[%s145] sm:$0xff]
  %s147 = scalar_lea.vmem %s1, 204
  %v148 = vpack.c.bf16 0.0, %v146
  %149 = vst [vmem:[%s147] sm:$0xf] %v148
  %s150 = scalar_lea.vmem %s0, 472
  %v151 = vld [vmem:[%s150] sm:$0xff]
  %s152 = scalar_lea.vmem %s1, 44
  %v153 = vpack.c.bf16 0.0, %v151
  %154 = vst [vmem:[%s152] sm:$0xf] %v153
  %s155 = scalar_lea.vmem %s0, 280
  %v156 = vld [vmem:[%s155] sm:$0xff]
  %s157 = scalar_lea.vmem %s1, 140
  %v158 = vpack.c.bf16 0.0, %v156
  %159 = vst [vmem:[%s157] sm:$0xf] %v158
  %s160 = scalar_lea.vmem %s0, 88
  %v161 = vld [vmem:[%s160] sm:$0xff]
  %s162 = scalar_lea.vmem %s1, 236
  %v163 = vpack.c.bf16 0.0, %v161
  %164 = vst [vmem:[%s162] sm:$0xf] %v163
  %s165 = scalar_lea.vmem %s0, 408
  %v166 = vld [vmem:[%s165] sm:$0xff]
  %s167 = scalar_lea.vmem %s1, 76
  %v168 = vpack.c.bf16 0.0, %v166
  %169 = vst [vmem:[%s167] sm:$0xf] %v168
  %s170 = scalar_lea.vmem %s0, 216
  %v171 = vld [vmem:[%s170] sm:$0xff]
  %s172 = scalar_lea.vmem %s1, 172
  %v173 = vpack.c.bf16 0.0, %v171
  %174 = vst [vmem:[%s172] sm:$0xf] %v173
  %s175 = scalar_lea.vmem %s0, 24
  %v176 = vld [vmem:[%s175] sm:$0xff]
  %s177 = scalar_lea.vmem %s1, 268
  %v178 = vpack.c.bf16 0.0, %v176
  %179 = vst [vmem:[%s177] sm:$0xf] %v178
  %s180 = scalar_lea.vmem %s0, 544
  %v181 = vld [vmem:[%s180] sm:$0xff]
  %s182 = scalar_lea.vmem %s1, 16
  %v183 = vpack.c.bf16 0.0, %v181
  %184 = vst [vmem:[%s182] sm:$0xf] %v183
  %s185 = scalar_lea.vmem %s0, 352
  %v186 = vld [vmem:[%s185] sm:$0xff]
  %s187 = scalar_lea.vmem %s1, 112
  %v188 = vpack.c.bf16 0.0, %v186
  %189 = vst [vmem:[%s187] sm:$0xf] %v188
  %s190 = scalar_lea.vmem %s0, 160
  %v191 = vld [vmem:[%s190] sm:$0xff]
  %s192 = scalar_lea.vmem %s1, 208
  %v193 = vpack.c.bf16 0.0, %v191
  %194 = vst [vmem:[%s192] sm:$0xf] %v193
  %s195 = scalar_lea.vmem %s0, 480
  %v196 = vld [vmem:[%s195] sm:$0xff]
  %s197 = scalar_lea.vmem %s1, 48
  %v198 = vpack.c.bf16 0.0, %v196
  %199 = vst [vmem:[%s197] sm:$0xf] %v198
  %s200 = scalar_lea.vmem %s0, 288
  %v201 = vld [vmem:[%s200] sm:$0xff]
  %s202 = scalar_lea.vmem %s1, 144
  %v203 = vpack.c.bf16 0.0, %v201
  %204 = vst [vmem:[%s202] sm:$0xf] %v203
  %s205 = scalar_lea.vmem %s0, 96
  %v206 = vld [vmem:[%s205] sm:$0xff]
  %s207 = scalar_lea.vmem %s1, 240
  %v208 = vpack.c.bf16 0.0, %v206
  %209 = vst [vmem:[%s207] sm:$0xf] %v208
  %s210 = scalar_lea.vmem %s0, 416
  %v211 = vld [vmem:[%s210] sm:$0xff]
  %s212 = scalar_lea.vmem %s1, 80
  %v213 = vpack.c.bf16 0.0, %v211
  %214 = vst [vmem:[%s212] sm:$0xf] %v213
  %s215 = scalar_lea.vmem %s0, 224
  %v216 = vld [vmem:[%s215] sm:$0xff]
  %s217 = scalar_lea.vmem %s1, 176
  %v218 = vpack.c.bf16 0.0, %v216
  %219 = vst [vmem:[%s217] sm:$0xf] %v218
  %s220 = scalar_lea.vmem %s0, 32
  %v221 = vld [vmem:[%s220] sm:$0xff]
  %s222 = scalar_lea.vmem %s1, 272
  %v223 = vpack.c.bf16 0.0, %v221
  %224 = vst [vmem:[%s222] sm:$0xf] %v223
  %s225 = scalar_lea.vmem %s0, 552
  %v226 = vld [vmem:[%s225] sm:$0xff]
  %s227 = scalar_lea.vmem %s1, 20
  %v228 = vpack.c.bf16 0.0, %v226
  %229 = vst [vmem:[%s227] sm:$0xf] %v228
  %s230 = scalar_lea.vmem %s0, 360
  %v231 = vld [vmem:[%s230] sm:$0xff]
  %s232 = scalar_lea.vmem %s1, 116
  %v233 = vpack.c.bf16 0.0, %v231
  %234 = vst [vmem:[%s232] sm:$0xf] %v233
  %s235 = scalar_lea.vmem %s0, 168
  %v236 = vld [vmem:[%s235] sm:$0xff]
  %s237 = scalar_lea.vmem %s1, 212
  %v238 = vpack.c.bf16 0.0, %v236
  %239 = vst [vmem:[%s237] sm:$0xf] %v238
  %s240 = scalar_lea.vmem %s0, 488
  %v241 = vld [vmem:[%s240] sm:$0xff]
  %s242 = scalar_lea.vmem %s1, 52
  %v243 = vpack.c.bf16 0.0, %v241
  %244 = vst [vmem:[%s242] sm:$0xf] %v243
  %s245 = scalar_lea.vmem %s0, 296
  %v246 = vld [vmem:[%s245] sm:$0xff]
  %s247 = scalar_lea.vmem %s1, 148
  %v248 = vpack.c.bf16 0.0, %v246
  %249 = vst [vmem:[%s247] sm:$0xf] %v248
  %s250 = scalar_lea.vmem %s0, 104
  %v251 = vld [vmem:[%s250] sm:$0xff]
  %s252 = scalar_lea.vmem %s1, 244
  %v253 = vpack.c.bf16 0.0, %v251
  %254 = vst [vmem:[%s252] sm:$0xf] %v253
  %s255 = scalar_lea.vmem %s0, 424
  %v256 = vld [vmem:[%s255] sm:$0xff]
  %s257 = scalar_lea.vmem %s1, 84
  %v258 = vpack.c.bf16 0.0, %v256
  %259 = vst [vmem:[%s257] sm:$0xf] %v258
  %s260 = scalar_lea.vmem %s0, 232
  %v261 = vld [vmem:[%s260] sm:$0xff]
  %s262 = scalar_lea.vmem %s1, 180
  %v263 = vpack.c.bf16 0.0, %v261
  %264 = vst [vmem:[%s262] sm:$0xf] %v263
  %s265 = scalar_lea.vmem %s0, 40
  %v266 = vld [vmem:[%s265] sm:$0xff]
  %s267 = scalar_lea.vmem %s1, 276
  %v268 = vpack.c.bf16 0.0, %v266
  %269 = vst [vmem:[%s267] sm:$0xf] %v268
  %s270 = scalar_lea.vmem %s0, 560
  %v271 = vld [vmem:[%s270] sm:$0xff]
  %s272 = scalar_lea.vmem %s1, 24
  %v273 = vpack.c.bf16 0.0, %v271
  %274 = vst [vmem:[%s272] sm:$0xf] %v273
  %s275 = scalar_lea.vmem %s0, 368
  %v276 = vld [vmem:[%s275] sm:$0xff]
  %s277 = scalar_lea.vmem %s1, 120
  %v278 = vpack.c.bf16 0.0, %v276
  %279 = vst [vmem:[%s277] sm:$0xf] %v278
  %s280 = scalar_lea.vmem %s0, 176
  %v281 = vld [vmem:[%s280] sm:$0xff]
  %s282 = scalar_lea.vmem %s1, 216
  %v283 = vpack.c.bf16 0.0, %v281
  %284 = vst [vmem:[%s282] sm:$0xf] %v283
  %s285 = scalar_lea.vmem %s0, 496
  %v286 = vld [vmem:[%s285] sm:$0xff]
  %s287 = scalar_lea.vmem %s1, 56
  %v288 = vpack.c.bf16 0.0, %v286
  %289 = vst [vmem:[%s287] sm:$0xf] %v288
  %s290 = scalar_lea.vmem %s0, 304
  %v291 = vld [vmem:[%s290] sm:$0xff]
  %s292 = scalar_lea.vmem %s1, 152
  %v293 = vpack.c.bf16 0.0, %v291
  %294 = vst [vmem:[%s292] sm:$0xf] %v293
  %s295 = scalar_lea.vmem %s0, 112
  %v296 = vld [vmem:[%s295] sm:$0xff]
  %s297 = scalar_lea.vmem %s1, 248
  %v298 = vpack.c.bf16 0.0, %v296
  %299 = vst [vmem:[%s297] sm:$0xf] %v298
  %s300 = scalar_lea.vmem %s0, 432
  %v301 = vld [vmem:[%s300] sm:$0xff]
  %s302 = scalar_lea.vmem %s1, 88
  %v303 = vpack.c.bf16 0.0, %v301
  %304 = vst [vmem:[%s302] sm:$0xf] %v303
  %s305 = scalar_lea.vmem %s0, 240
  %v306 = vld [vmem:[%s305] sm:$0xff]
  %s307 = scalar_lea.vmem %s1, 184
  %v308 = vpack.c.bf16 0.0, %v306
  %309 = vst [vmem:[%s307] sm:$0xf] %v308
  %s310 = scalar_lea.vmem %s0, 48
  %v311 = vld [vmem:[%s310] sm:$0xff]
  %s312 = scalar_lea.vmem %s1, 280
  %v313 = vpack.c.bf16 0.0, %v311
  %314 = vst [vmem:[%s312] sm:$0xf] %v313
  %s315 = scalar_lea.vmem %s0, 568
  %v316 = vld [vmem:[%s315] sm:$0xff]
  %s317 = scalar_lea.vmem %s1, 28
  %v318 = vpack.c.bf16 0.0, %v316
  %319 = vst [vmem:[%s317] sm:$0xf] %v318
  %s320 = scalar_lea.vmem %s0, 376
  %v321 = vld [vmem:[%s320] sm:$0xff]
  %s322 = scalar_lea.vmem %s1, 124
  %v323 = vpack.c.bf16 0.0, %v321
  %324 = vst [vmem:[%s322] sm:$0xf] %v323
  %s325 = scalar_lea.vmem %s0, 184
  %v326 = vld [vmem:[%s325] sm:$0xff]
  %s327 = scalar_lea.vmem %s1, 220
  %v328 = vpack.c.bf16 0.0, %v326
  %329 = vst [vmem:[%s327] sm:$0xf] %v328
  %s330 = scalar_lea.vmem %s0, 504
  %v331 = vld [vmem:[%s330] sm:$0xff]
  %s332 = scalar_lea.vmem %s1, 60
  %v333 = vpack.c.bf16 0.0, %v331
  %334 = vst [vmem:[%s332] sm:$0xf] %v333
  %s335 = scalar_lea.vmem %s0, 312
  %v336 = vld [vmem:[%s335] sm:$0xff]
  %s337 = scalar_lea.vmem %s1, 156
  %v338 = vpack.c.bf16 0.0, %v336
  %339 = vst [vmem:[%s337] sm:$0xf] %v338
  %s340 = scalar_lea.vmem %s0, 120
  %v341 = vld [vmem:[%s340] sm:$0xff]
  %s342 = scalar_lea.vmem %s1, 252
  %v343 = vpack.c.bf16 0.0, %v341
  %344 = vst [vmem:[%s342] sm:$0xf] %v343
  %s345 = scalar_lea.vmem %s0, 440
  %v346 = vld [vmem:[%s345] sm:$0xff]
  %s347 = scalar_lea.vmem %s1, 92
  %v348 = vpack.c.bf16 0.0, %v346
  %349 = vst [vmem:[%s347] sm:$0xf] %v348
  %s350 = scalar_lea.vmem %s0, 248
  %v351 = vld [vmem:[%s350] sm:$0xff]
  %s352 = scalar_lea.vmem %s1, 188
  %v353 = vpack.c.bf16 0.0, %v351
  %354 = vst [vmem:[%s352] sm:$0xf] %v353
  %s355 = scalar_lea.vmem %s0, 56
  %v356 = vld [vmem:[%s355] sm:$0xff]
  %s357 = scalar_lea.vmem %s1, 284
  %v358 = vpack.c.bf16 0.0, %v356
  %359 = vst [vmem:[%s357] sm:$0xf] %v358

// kernel: decoder_forward.3
$region0: #{decoder_forward.3}
  #allocation0 [shape = 'u32[]', space=smem, size = 0x4, offset = 0x4, fixed_abs, tag = 'smem constant byte address 0x4 - core index']
  #allocation1 [shape = 'u32[144,128]{1,0:T(1,128)}', space=vmem, size = 0x12000, scoped, tag = 'internal scratch']
  %s0 = inlined_call_operand.vmem [shape: bf16[80,576], index: 0, kind: input, shape index: {}]
  %s1 = inlined_call_operand.vmem [shape: bf16[576,64], index: 1, kind: input, shape index: {}]
  %s2 = inlined_call_operand.vmem [shape: f32[1,64], index: 2, kind: input, shape index: {}]
  %s3 = inlined_call_operand.vmem [shape: f32[80,64], index: 3, kind: output, shape index: {}]
  %s4 = sld [smem:[#allocation0]]
  $region45: #{decoder_forward.3} parent=0
    _
  %s6 = ssub.s32 1, %s4
  %s7 = scalar_select 0, %s6, %s4
  loop: start=0, step=1, limit=4
  $region2: #{decoder_forward.3} parent=0 // loop_pre_header
    _
  $region3: #{decoder_forward.3} parent=0 // loop_header
    %s9 = sphi 0, %s13
    %p10 = scmp.ge.s32.totalorder %s9, 4
    %s19 = sphi 0, %s21
    %s22 = sphi 0, %s19
    %s23 = sphi 0, %s22
    %s39 = sphi 0, %s23
    %s43 = sphi 0, %s43
    %s45 = sphi 0, %s43
    %s46 = sphi 0, %s45
    %s60 = sphi 0, %s46
    %s64 = sphi 0, %s64
    %s66 = sphi 0, %s64
    %s67 = sphi 0, %s66
    %s81 = sphi 0, %s67
    %s87 = sphi 0, %s89
    %s90 = sphi 0, %s87
    %s91 = sphi 0, %s90
    %s107 = sphi 0, %s91
  $region4: #{decoder_forward.3} parent=0 // loop_header_branch
    %12 = sbr.rel (%p10) target = $region8
  $region5: #{decoder_forward.3} parent=0 // loop_body
    %s14 = ssub.s32 %s9, 1
    %s15 = ssub.s32 %s9, 2
    %s16 = sadd.s32 %s9, 1
    %s17 = ssub.s32 %s9, %s16
    %p18 = scmp.eq.s32.totalorder %s17, 0
    %s20 = sadd.s32 %s19, 1
    %s21 = scalar_select %p18, %s19, %s20
    %p24 = pneg %p18
    %p25 = scmp.eq.s32.totalorder %s9, 1
    %p26 = por %p24, %p25
    %p27 = scmp.ne.s32.totalorder %s19, %s22
    %p28 = scmp.eq.s32.totalorder %s9, 0
    %p29 = por %p27, %p28
    %p30 = scmp.ne.s32.totalorder %s19, %s22
    %p31 = scmp.eq.s32.totalorder %s14, 1
    %p32 = por %p30, %p31
    %p33 = scmp.ne.s32.totalorder %s22, %s23
    %p34 = scmp.eq.s32.totalorder %s14, 0
    %p35 = por %p33, %p34
    %p36 = scmp.ne.s32.totalorder %s22, %s23
    %p37 = scmp.eq.s32.totalorder %s15, 1
    %p38 = por %p36, %p37
    %p40 = scmp.ne.s32.totalorder %s23, %s39
    %p41 = scmp.eq.s32.totalorder %s15, 0
    %p42 = por %p40, %p41
    %s44 = sadd.s32 %s43, 1
    %p47 = scmp.eq.s32.totalorder %s9, 1
    %p48 = scmp.ne.s32.totalorder %s43, %s45
    %p49 = scmp.eq.s32.totalorder %s9, 0
    %p50 = por %p48, %p49
    %p51 = scmp.ne.s32.totalorder %s43, %s45
    %p52 = scmp.eq.s32.totalorder %s14, 1
    %p53 = por %p51, %p52
    %p54 = scmp.ne.s32.totalorder %s45, %s46
    %p55 = scmp.eq.s32.totalorder %s14, 0
    %p56 = por %p54, %p55
    %p57 = scmp.ne.s32.totalorder %s45, %s46
    %p58 = scmp.eq.s32.totalorder %s15, 1
    %p59 = por %p57, %p58
    %p61 = scmp.ne.s32.totalorder %s46, %s60
    %p62 = scmp.eq.s32.totalorder %s15, 0
    %p63 = por %p61, %p62
    %s65 = sadd.s32 %s64, 1
    %p68 = scmp.eq.s32.totalorder %s9, 1
    %p69 = scmp.ne.s32.totalorder %s64, %s66
    %p70 = scmp.eq.s32.totalorder %s9, 0
    %p71 = por %p69, %p70
    %p72 = scmp.ne.s32.totalorder %s64, %s66
    %p73 = scmp.eq.s32.totalorder %s14, 1
    %p74 = por %p72, %p73
    %p75 = scmp.ne.s32.totalorder %s66, %s67
    %p76 = scmp.eq.s32.totalorder %s14, 0
    %p77 = por %p75, %p76
    %p78 = scmp.ne.s32.totalorder %s66, %s67
    %p79 = scmp.eq.s32.totalorder %s15, 1
    %p80 = por %p78, %p79
    %p82 = scmp.ne.s32.totalorder %s67, %s81
    %p83 = scmp.eq.s32.totalorder %s15, 0
    %p84 = por %p82, %p83
    %s85 = ssub.s32 %s9, %s16
    %p86 = scmp.eq.s32.totalorder %s85, 0
    %s88 = sadd.s32 %s87, 1
    %s89 = scalar_select %p86, %s87, %s88
    %p92 = pneg %p86
    %p93 = scmp.eq.s32.totalorder %s9, 1
    %p94 = por %p92, %p93
    %p95 = scmp.ne.s32.totalorder %s87, %s90
    %p96 = scmp.eq.s32.totalorder %s9, 0
    %p97 = por %p95, %p96
    %p98 = scmp.ne.s32.totalorder %s87, %s90
    %p99 = scmp.eq.s32.totalorder %s14, 1
    %p100 = por %p98, %p99
    %p101 = scmp.ne.s32.totalorder %s90, %s91
    %p102 = scmp.eq.s32.totalorder %s14, 0
    %p103 = por %p101, %p102
    %p104 = scmp.ne.s32.totalorder %s90, %s91
    %p105 = scmp.eq.s32.totalorder %s15, 1
    %p106 = por %p104, %p105
    %p108 = scmp.ne.s32.totalorder %s91, %s107
    %p109 = scmp.eq.s32.totalorder %s15, 0
    %p110 = por %p108, %p109
    %p111 = scmp.le.s32.totalorder 1, %s9
    %p112 = scmp.lt.s32.totalorder %s9, 3
    %p113 = pnand %p111, %p112
    %p114 = pneg %p113
    // Predicated region
    $region9: #{decoder_forward.3} parent=5 // pred_check
      _
    $region10: #{decoder_forward.3} parent=5 // pred_check_branch
      %116 = sbr.rel (%p113) target = $region12
    $region11: #{decoder_forward.3} parent=5 // pred_region
      %s117 = ssub.s32 %s9, 1
      // Predicated region
      $region13: #{decoder_forward.3} parent=11 // pred_check
        %p118 = pneg %p56
      $region14: #{decoder_forward.3} parent=11 // pred_check_branch
        %120 = sbr.rel (%p118) target = $region16
      $region15: #{decoder_forward.3} parent=11 // pred_region
        _
      $region16: #{decoder_forward.3} parent=11 // pred_fallthru
        _
      // Predicated region
      $region17: #{decoder_forward.3} parent=11 // pred_check
        %p121 = pneg %p77
      $region18: #{decoder_forward.3} parent=11 // pred_check_branch
        %123 = sbr.rel (%p121) target = $region20
      $region19: #{decoder_forward.3} parent=11 // pred_region
        _
      $region20: #{decoder_forward.3} parent=11 // pred_fallthru
        _
    $region12: #{decoder_forward.3} parent=5 // pred_fallthru
      _
    %p124 = scmp.lt.s32.totalorder %s9, 2
    // Predicated region
    $region21: #{decoder_forward.3} parent=5 // pred_check
      %p125 = pneg %p124
    $region22: #{decoder_forward.3} parent=5 // pred_check_branch
      %127 = sbr.rel (%p125) target = $region24
    $region23: #{decoder_forward.3} parent=5 // pred_region
      // Predicated region
      $region25: #{decoder_forward.3} parent=23 // pred_check
        %p128 = pneg %p29
      $region26: #{decoder_forward.3} parent=23 // pred_check_branch
        %130 = sbr.rel (%p128) target = $region28
      $region27: #{decoder_forward.3} parent=23 // pred_region
        %s131 = smul.u32 5, %s9
        %p132 = scmp.lt.s32.totalorder %s131, 9
        %s133 = scalar_select %p132, %s131, 9
        %s134 = smul.addr %s133, 5
        %s135 = smul.addr %s134, 4
        %s136 = scalar_lea.vmem %s0, %s135
        %s137 = smul.u32 5, %s9
      $region28: #{decoder_forward.3} parent=23 // pred_fallthru
        _
    $region24: #{decoder_forward.3} parent=5 // pred_fallthru
      _
    %p138 = scmp.le.s32.totalorder 1, %s9
    %p139 = scmp.lt.s32.totalorder %s9, 3
    %p140 = pnand %p138, %p139
    %p141 = pneg %p140
    // Predicated region
    $region29: #{decoder_forward.3} parent=5 // pred_check
      _
    $region30: #{decoder_forward.3} parent=5 // pred_check_branch
      %143 = sbr.rel (%p140) target = $region32
    $region31: #{decoder_forward.3} parent=5 // pred_region
      %s144 = ssub.s32 %s9, 1
      %s145 = smul.u32 5, %s14
      %p146 = scmp.lt.s32.totalorder %s145, 9
      %s147 = scalar_select %p146, %s145, 9
      %s148 = smul.addr %s147, 5
      %s149 = smul.addr %s148, 4
      %s150 = scalar_lea.vmem %s0, %s149
      %p151 = pneg %p35
      %p152 = pneg %p32
      %p153 = pneg %p56
      %p154 = pneg %p53
      %p155 = pneg %p77
      %p156 = pneg %p74
      %p157 = pneg %p103
      %p158 = pneg %p100
      %s159 = smul.u32 5, %s14
      %p160 = scmp.lt.s32.totalorder %s159, 9
      %s161 = scalar_select %p160, %s159, 9
      %s162 = smul.addr %s161, 8
      %s163 = scalar_lea.vmem %s3, %s162
      %s164 = smul.u32 5, %s14
      %p165 = scmp.lt.s32.totalorder %s164, 9
      %s166 = scalar_select %p165, %s164, 9
      %s167 = smul.addr %s166, 5
      %s168 = smul.addr %s167, 4
      %s169 = scalar_lea.vmem %s0, %s168
      %s170 = smul.u32 5, %s14
      %s171 = smul.u32 5, %s14
      %p172 = scmp.lt.s32.totalorder %s171, 9
      %s173 = scalar_select %p172, %s171, 9
      %s174 = smul.addr %s173, 8
      %s175 = scalar_lea.vmem %s3, %s174
      %s176 = smul.u32 5, %s14
      %v178 = vld [vmem:[%s169] sm:$0xff]
      %v179 = vld [vmem:[%s169 + $0x8] sm:$0xff]
      %v180 = vld [vmem:[%s169 + $0x10] sm:$0xf]
      %v181 = vld [vmem:[%s169 + $0x14] sm:$0xff]
      %v182 = vld [vmem:[%s169 + $0x1c] sm:$0xff]
      %v183 = vld [vmem:[%s169 + $0x24] sm:$0xf]
      %v184 = vld [vmem:[%s169 + $0x28] sm:$0xff]
      %v185 = vld [vmem:[%s169 + $0x30] sm:$0xff]
      %v186 = vld [vmem:[%s169 + $0x38] sm:$0xf]
      %v187 = vld [vmem:[%s169 + $0x3c] sm:$0xff]
      %v188 = vld [vmem:[%s169 + $0x44] sm:$0xff]
      %v189 = vld [vmem:[%s169 + $0x4c] sm:$0xf]
      %v190 = vld [vmem:[%s169 + $0x50] sm:$0xff]
      %v191 = vld [vmem:[%s169 + $0x58] sm:$0xff]
      %v192 = vld [vmem:[%s169 + $0x60] sm:$0xf]
      %v193 = vld [vmem:[%s1] sm:$0xf]
      %v194 = vld [vmem:[%s1 + $0x4] sm:$0xf]
      %v195 = vld [vmem:[%s1 + $0x8] sm:$0xf]
      %v196 = vld [vmem:[%s1 + $0xc] sm:$0xf]
      %v197 = vld [vmem:[%s1 + $0x10] sm:$0xf]
      %v198 = vld [vmem:[%s1 + $0x14] sm:$0xf]
      %v199 = vld [vmem:[%s1 + $0x18] sm:$0xf]
      %v200 = vld [vmem:[%s1 + $0x1c] sm:$0xf]
      %v201 = vld [vmem:[%s1 + $0x20] sm:$0xf]
      %v202 = vld [vmem:[%s1 + $0x24] sm:$0xf]
      %v203 = vld [vmem:[%s1 + $0x28] sm:$0xf]
      %v204 = vld [vmem:[%s1 + $0x2c] sm:$0xf]
      %v205 = vld [vmem:[%s1 + $0x30] sm:$0xf]
      %v206 = vld [vmem:[%s1 + $0x34] sm:$0xf]
      %v207 = vld [vmem:[%s1 + $0x38] sm:$0xf]
      %v208 = vld [vmem:[%s1 + $0x3c] sm:$0xf]
      %v209 = vld [vmem:[%s1 + $0x40] sm:$0xf]
      %v210 = vld [vmem:[%s1 + $0x44] sm:$0xf]
      %v211 = vld [vmem:[%s1 + $0x48] sm:$0xf]
      %v212 = vld [vmem:[%s1 + $0x4c] sm:$0xf]
      %v213 = vld [vmem:[%s1 + $0x50] sm:$0xf]
      %v214 = vld [vmem:[%s1 + $0x54] sm:$0xf]
      %v215 = vld [vmem:[%s1 + $0x58] sm:$0xf]
      %v216 = vld [vmem:[%s1 + $0x5c] sm:$0xf]
      %v217 = vld [vmem:[%s1 + $0x60] sm:$0xf]
      %v218 = vld [vmem:[%s1 + $0x64] sm:$0xf]
      %v219 = vld [vmem:[%s1 + $0x68] sm:$0xf]
      %v220 = vld [vmem:[%s1 + $0x6c] sm:$0xf]
      %v221 = vld [vmem:[%s1 + $0x70] sm:$0xf]
      %v222 = vld [vmem:[%s1 + $0x74] sm:$0xf]
      %v223 = vld [vmem:[%s1 + $0x78] sm:$0xf]
      %v224 = vld [vmem:[%s1 + $0x7c] sm:$0xf]
      %v225 = vld [vmem:[%s1 + $0x80] sm:$0xf]
      %v226 = vld [vmem:[%s1 + $0x84] sm:$0xf]
      %v227 = vld [vmem:[%s1 + $0x88] sm:$0xf]
      %v228 = vld [vmem:[%s1 + $0x8c] sm:$0xf]
      %v229 = vld [vmem:[%s1 + $0x90] sm:$0xf]
      %v230 = vld [vmem:[%s1 + $0x94] sm:$0xf]
      %v231 = vld [vmem:[%s1 + $0x98] sm:$0xf]
      %v232 = vld [vmem:[%s1 + $0x9c] sm:$0xf]
      %v233 = vld [vmem:[%s1 + $0xa0] sm:$0xf]
      %v234 = vld [vmem:[%s1 + $0xa4] sm:$0xf]
      %v235 = vld [vmem:[%s1 + $0xa8] sm:$0xf]
      %v236 = vld [vmem:[%s1 + $0xac] sm:$0xf]
      %v237 = vld [vmem:[%s1 + $0xb0] sm:$0xf]
      %v238 = vld [vmem:[%s1 + $0xb4] sm:$0xf]
      %v239 = vld [vmem:[%s1 + $0xb8] sm:$0xf]
      %v240 = vld [vmem:[%s1 + $0xbc] sm:$0xf]
      %v241 = vld [vmem:[%s1 + $0xc0] sm:$0xf]
      %v242 = vld [vmem:[%s1 + $0xc4] sm:$0xf]
      %v243 = vld [vmem:[%s1 + $0xc8] sm:$0xf]
      %v244 = vld [vmem:[%s1 + $0xcc] sm:$0xf]
      %v245 = vld [vmem:[%s1 + $0xd0] sm:$0xf]
      %v246 = vld [vmem:[%s1 + $0xd4] sm:$0xf]
      %v247 = vld [vmem:[%s1 + $0xd8] sm:$0xf]
      %v248 = vld [vmem:[%s1 + $0xdc] sm:$0xf]
      %v249 = vld [vmem:[%s1 + $0xe0] sm:$0xf]
      %v250 = vld [vmem:[%s1 + $0xe4] sm:$0xf]
      %v251 = vld [vmem:[%s1 + $0xe8] sm:$0xf]
      %v252 = vld [vmem:[%s1 + $0xec] sm:$0xf]
      %v253 = vld [vmem:[%s1 + $0xf0] sm:$0xf]
      %v254 = vld [vmem:[%s1 + $0xf4] sm:$0xf]
      %v255 = vld [vmem:[%s1 + $0xf8] sm:$0xf]
      %v256 = vld [vmem:[%s1 + $0xfc] sm:$0xf]
      %v257 = vld [vmem:[%s1 + $0x100] sm:$0xf]
      %v258 = vld [vmem:[%s1 + $0x104] sm:$0xf]
      %v259 = vld [vmem:[%s1 + $0x108] sm:$0xf]
      %v260 = vld [vmem:[%s1 + $0x10c] sm:$0xf]
      %v261 = vld [vmem:[%s1 + $0x110] sm:$0xf]
      %v262 = vld [vmem:[%s1 + $0x114] sm:$0xf]
      %v263 = vld [vmem:[%s1 + $0x118] sm:$0xf]
      %v264 = vld [vmem:[%s1 + $0x11c] sm:$0xf]
      %v265 = vld [vmem:[%s2] sm:$0x1]
      %v267 = vlaneseq
      %v268 = vshrl.u32 %v267, 7
      %v269 = vsub.s32 0, %v268
      %v270 = vrot.slane %v265, %v269
      %v287 = vunpack.c.l.b16 %v178
      %v288 = vunpack.c.h.b16 %v178
      %v289 = vunpack.c.l.b16 %v179
      %v290 = vunpack.c.h.b16 %v179
      %v291 = vunpack.c.l.b16 %v180
      %v292 = vunpack.c.l.b16 %v181
      %v293 = vunpack.c.h.b16 %v181
      %v294 = vunpack.c.l.b16 %v182
      %v295 = vunpack.c.h.b16 %v182
      %v296 = vunpack.c.l.b16 %v183
      %v297 = vunpack.c.l.b16 %v184
      %v298 = vunpack.c.h.b16 %v184
      %v299 = vunpack.c.l.b16 %v185
      %v300 = vunpack.c.h.b16 %v185
      %v301 = vunpack.c.l.b16 %v186
      %v302 = vunpack.c.l.b16 %v187
      %v303 = vunpack.c.h.b16 %v187
      %v304 = vunpack.c.l.b16 %v188
      %v305 = vunpack.c.h.b16 %v188
      %v306 = vunpack.c.l.b16 %v189
      %v307 = vunpack.c.l.b16 %v190
      %v308 = vunpack.c.h.b16 %v190
      %v309 = vunpack.c.l.b16 %v191
      %v310 = vunpack.c.h.b16 %v191
      %v311 = vunpack.c.l.b16 %v192
      %v312 = vpack.c.b16 %v292, %v287
      %v313 = vpack.c.b16 %v293, %v288
      %v314 = vpack.c.b16 %v294, %v289
      %v315 = vpack.c.b16 %v295, %v290
      %v316 = vpack.c.b16 %v296, %v291
      %v317 = vpack.c.b16 %v302, %v297
      %v318 = vpack.c.b16 %v303, %v298
      %v319 = vpack.c.b16 %v304, %v299
      %v320 = vpack.c.b16 %v305, %v300
      %v321 = vpack.c.b16 %v306, %v301
      %v322 = vpack.c.b16 %v307, %v307
      %v323 = vpack.c.b16 %v308, %v308
      %v324 = vpack.c.b16 %v309, %v309
      %v325 = vpack.c.b16 %v310, %v310
      %v326 = vpack.c.b16 %v311, %v311
      %v411 = vunpack.c.l.b16 %v193
      %v412 = vunpack.c.l.b16 %v194
      %v413 = vunpack.c.l.b16 %v195
      %v414 = vunpack.c.l.b16 %v196
      %v415 = vunpack.c.l.b16 %v197
      %v416 = vunpack.c.l.b16 %v198
      %v417 = vunpack.c.l.b16 %v199
      %v418 = vunpack.c.l.b16 %v200
      %v419 = vunpack.c.l.b16 %v201
      %v420 = vunpack.c.l.b16 %v202
      %v421 = vunpack.c.l.b16 %v203
      %v422 = vunpack.c.l.b16 %v204
      %v423 = vunpack.c.l.b16 %v205
      %v424 = vunpack.c.l.b16 %v206
      %v425 = vunpack.c.l.b16 %v207
      %v426 = vunpack.c.l.b16 %v208
      %v427 = vunpack.c.l.b16 %v209
      %v428 = vunpack.c.l.b16 %v210
      %v429 = vunpack.c.l.b16 %v211
      %v430 = vunpack.c.l.b16 %v212
      %v431 = vunpack.c.l.b16 %v213
      %v432 = vunpack.c.l.b16 %v214
      %v433 = vunpack.c.l.b16 %v215
      %v434 = vunpack.c.l.b16 %v216
      %v435 = vunpack.c.l.b16 %v217
      %v436 = vunpack.c.l.b16 %v218
      %v437 = vunpack.c.l.b16 %v219
      %v438 = vunpack.c.l.b16 %v220
      %v439 = vunpack.c.l.b16 %v221
      %v440 = vunpack.c.l.b16 %v222
      %v441 = vunpack.c.l.b16 %v223
      %v442 = vunpack.c.l.b16 %v224
      %v443 = vunpack.c.l.b16 %v225
      %v444 = vunpack.c.l.b16 %v226
      %v445 = vunpack.c.l.b16 %v227
      %v446 = vunpack.c.l.b16 %v228
      %v447 = vunpack.c.l.b16 %v229
      %v448 = vunpack.c.l.b16 %v230
      %v449 = vunpack.c.l.b16 %v231
      %v450 = vunpack.c.l.b16 %v232
      %v451 = vunpack.c.l.b16 %v233
      %v452 = vunpack.c.l.b16 %v234
      %v453 = vunpack.c.l.b16 %v235
      %v454 = vunpack.c.l.b16 %v236
      %v455 = vunpack.c.l.b16 %v237
      %v456 = vunpack.c.l.b16 %v238
      %v457 = vunpack.c.l.b16 %v239
      %v458 = vunpack.c.l.b16 %v240
      %v459 = vunpack.c.l.b16 %v241
      %v460 = vunpack.c.l.b16 %v242
      %v461 = vunpack.c.l.b16 %v243
      %v462 = vunpack.c.l.b16 %v244
      %v463 = vunpack.c.l.b16 %v245
      %v464 = vunpack.c.l.b16 %v246
      %v465 = vunpack.c.l.b16 %v247
      %v466 = vunpack.c.l.b16 %v248
      %v467 = vunpack.c.l.b16 %v249
      %v468 = vunpack.c.l.b16 %v250
      %v469 = vunpack.c.l.b16 %v251
      %v470 = vunpack.c.l.b16 %v252
      %v471 = vunpack.c.l.b16 %v253
      %v472 = vunpack.c.l.b16 %v254
      %v473 = vunpack.c.l.b16 %v255
      %v474 = vunpack.c.l.b16 %v256
      %v475 = vunpack.c.l.b16 %v257
      %v476 = vunpack.c.l.b16 %v258
      %v477 = vunpack.c.l.b16 %v259
      %v478 = vunpack.c.l.b16 %v260
      %v479 = vunpack.c.l.b16 %v261
      %v480 = vunpack.c.l.b16 %v262
      %v481 = vunpack.c.l.b16 %v263
      %v482 = vunpack.c.l.b16 %v264
      %v483 = vpack.c.b16 %v412, %v411
      %v484 = vpack.c.b16 %v414, %v413
      %v485 = vpack.c.b16 %v416, %v415
      %v486 = vpack.c.b16 %v418, %v417
      %v487 = vpack.c.b16 %v420, %v419
      %v488 = vpack.c.b16 %v422, %v421
      %v489 = vpack.c.b16 %v424, %v423
      %v490 = vpack.c.b16 %v426, %v425
      %v491 = vpack.c.b16 %v428, %v427
      %v492 = vpack.c.b16 %v430, %v429
      %v493 = vpack.c.b16 %v432, %v431
      %v494 = vpack.c.b16 %v434, %v433
      %v495 = vpack.c.b16 %v436, %v435
      %v496 = vpack.c.b16 %v438, %v437
      %v497 = vpack.c.b16 %v440, %v439
      %v498 = vpack.c.b16 %v442, %v441
      %v499 = vpack.c.b16 %v444, %v443
      %v500 = vpack.c.b16 %v446, %v445
      %v501 = vpack.c.b16 %v448, %v447
      %v502 = vpack.c.b16 %v450, %v449
      %v503 = vpack.c.b16 %v452, %v451
      %v504 = vpack.c.b16 %v454, %v453
      %v505 = vpack.c.b16 %v456, %v455
      %v506 = vpack.c.b16 %v458, %v457
      %v507 = vpack.c.b16 %v460, %v459
      %v508 = vpack.c.b16 %v462, %v461
      %v509 = vpack.c.b16 %v464, %v463
      %v510 = vpack.c.b16 %v466, %v465
      %v511 = vpack.c.b16 %v468, %v467
      %v512 = vpack.c.b16 %v470, %v469
      %v513 = vpack.c.b16 %v472, %v471
      %v514 = vpack.c.b16 %v474, %v473
      %v515 = vpack.c.b16 %v476, %v475
      %v516 = vpack.c.b16 %v478, %v477
      %v517 = vpack.c.b16 %v480, %v479
      %v518 = vpack.c.b16 %v482, %v481
      %vm555 = vcmask 523264
      %v557 = vsel %vm555, %v316, 0
      %v560 = vsel %vm555, %v321, 0
      %v563 = vsel %vm555, %v326, 0
      %565 = vmatprep.subr.bf16.mxu0 0
      %566 = vmatpush1.bf16.msra.mxu0 %v483
      %567 = vmatprep.subr.bf16.mxu0 0
      %568 = vmatpush1.bf16.msra.mxu0 %v484
      %569 = vmatprep.subr.bf16.mxu0 0
      %570 = vmatpush1.bf16.msra.mxu0 %v485
      %571 = vmatprep.subr.bf16.mxu0 0
      %572 = vmatpush1.bf16.msra.mxu0 %v486
      %573 = vmatprep.subr.bf16.mxu0 0
      %574 = vmatpush1.bf16.msra.mxu0 %v487
      %575 = vmatprep.subr.bf16.mxu0 0
      %576 = vmatpush1.bf16.msra.mxu0 %v488
      %577 = vmatprep.subr.bf16.mxu0 0
      %578 = vmatpush1.bf16.msra.mxu0 %v489
      %579 = vmatprep.subr.bf16.mxu0 0
      %580 = vmatpush1.bf16.msra.mxu0 %v490
      %581 = vmatprep.subr.bf16.mxu0 0
      %582 = vmatpush1.bf16.msra.mxu0 %v491
      %583 = vmatprep.subr.bf16.mxu0 0
      %584 = vmatpush1.bf16.msra.mxu0 %v492
      %585 = vmatprep.subr.bf16.mxu0 0
      %586 = vmatpush1.bf16.msra.mxu0 %v493
      %587 = vmatprep.subr.bf16.mxu0 0
      %588 = vmatpush1.bf16.msra.mxu0 %v494
      %589 = vmatprep.subr.bf16.mxu0 0
      %590 = vmatpush1.bf16.msra.mxu0 %v495
      %591 = vmatprep.subr.bf16.mxu0 0
      %592 = vmatpush1.bf16.msra.mxu0 %v496
      %593 = vmatprep.subr.bf16.mxu0 0
      %594 = vmatpush1.bf16.msra.mxu0 %v497
      %595 = vmatprep.subr.bf16.mxu0 0
      %596 = vmatpush1.bf16.msra.mxu0 %v498
      %597 = vmatprep.mubr.bf16.mxu0 %v313
      %598 = vmatmul.mubr.bf16.gmra.mrb[0].mxu0 %v312
      %v599 = vpop.f32.mrb[0].mxu0
      %v600 = vadd.f32 %v270, %v599
      %v601 = vpop.f32.mrb[0].mxu0
      %v602 = vpop.f32.mrb[0].mxu0
      %v603 = vadd.f32 %v270, %v602
      %v604 = vpop.f32.mrb[0].mxu0
      %605 = vmatprep.mubr.bf16.mxu0 %v318
      %606 = vmatmul.mubr.bf16.gmra.mrb[0].mxu0 %v317
      %v607 = vpop.f32.mrb[0].mxu0
      %v608 = vadd.f32 %v270, %v607
      %v609 = vpop.f32.mrb[0].mxu0
      %v610 = vpop.f32.mrb[0].mxu0
      %v611 = vadd.f32 %v270, %v610
      %v612 = vpop.f32.mrb[0].mxu0
      %613 = vmatprep.mubr.bf16.mxu0 %v323
      %614 = vmatmul.mubr.bf16.gmra.mrb[0].mxu0 %v322
      %v615 = vpop.f32.mrb[0].mxu0
      %v616 = vadd.f32 %v270, %v615
      %v617 = vpop.f32.mrb[0].mxu0
      %v618 = vpop.f32.mrb[0].mxu0
      %v619 = vpop.f32.mrb[0].mxu0
      %620 = vdwg.mxu0
      %621 = vmatprep.subr.bf16.mxu0 0
      %622 = vmatpush1.bf16.msra.mxu0 %v499
      %623 = vmatprep.subr.bf16.mxu0 0
      %624 = vmatpush1.bf16.msra.mxu0 %v500
      %625 = vmatprep.subr.bf16.mxu0 0
      %626 = vmatpush1.bf16.msra.mxu0 %v501
      %627 = vmatprep.subr.bf16.mxu0 0
      %628 = vmatpush1.bf16.msra.mxu0 %v502
      %629 = vmatprep.subr.bf16.mxu0 0
      %630 = vmatpush1.bf16.msra.mxu0 %v503
      %631 = vmatprep.subr.bf16.mxu0 0
      %632 = vmatpush1.bf16.msra.mxu0 %v504
      %633 = vmatprep.subr.bf16.mxu0 0
      %634 = vmatpush1.bf16.msra.mxu0 %v505
      %635 = vmatprep.subr.bf16.mxu0 0
      %636 = vmatpush1.bf16.msra.mxu0 %v506
      %637 = vmatprep.subr.bf16.mxu0 0
      %638 = vmatpush1.bf16.msra.mxu0 %v507
      %639 = vmatprep.subr.bf16.mxu0 0
      %640 = vmatpush1.bf16.msra.mxu0 %v508
      %641 = vmatprep.subr.bf16.mxu0 0
      %642 = vmatpush1.bf16.msra.mxu0 %v509
      %643 = vmatprep.subr.bf16.mxu0 0
      %644 = vmatpush1.bf16.msra.mxu0 %v510
      %645 = vmatprep.subr.bf16.mxu0 0
      %646 = vmatpush1.bf16.msra.mxu0 %v511
      %647 = vmatprep.subr.bf16.mxu0 0
      %648 = vmatpush1.bf16.msra.mxu0 %v512
      %649 = vmatprep.subr.bf16.mxu0 0
      %650 = vmatpush1.bf16.msra.mxu0 %v513
      %651 = vmatprep.subr.bf16.mxu0 0
      %652 = vmatpush1.bf16.msra.mxu0 %v514
      %653 = vmatprep.mubr.bf16.mxu0 %v315
      %654 = vmatmul.mubr.bf16.gmra.mrb[0].mxu0 %v314
      %v655 = vpop.f32.mrb[0].mxu0
      %v656 = vadd.f32 %v600, %v655
      %v657 = vpop.f32.mrb[0].mxu0
      %v658 = vpop.f32.mrb[0].mxu0
      %v659 = vadd.f32 %v603, %v658
      %v660 = vpop.f32.mrb[0].mxu0
      %661 = vmatprep.mubr.bf16.mxu0 %v320
      %662 = vmatmul.mubr.bf16.gmra.mrb[0].mxu0 %v319
      %v663 = vpop.f32.mrb[0].mxu0
      %v664 = vadd.f32 %v608, %v663
      %v665 = vpop.f32.mrb[0].mxu0
      %v666 = vpop.f32.mrb[0].mxu0
      %v667 = vadd.f32 %v611, %v666
      %v668 = vpop.f32.mrb[0].mxu0
      %669 = vmatprep.mubr.bf16.mxu0 %v325
      %670 = vmatmul.mubr.bf16.gmra.mrb[0].mxu0 %v324
      %v671 = vpop.f32.mrb[0].mxu0
      %v672 = vadd.f32 %v616, %v671
      %v673 = vpop.f32.mrb[0].mxu0
      %v674 = vpop.f32.mrb[0].mxu0
      %v675 = vpop.f32.mrb[0].mxu0
      %676 = vdwg.mxu0
      %677 = vmatprep.subr.bf16.mxu0 0
      %678 = vmatpush1.bf16.msra.mxu0 %v515
      %679 = vmatprep.subr.bf16.mxu0 0
      %680 = vmatpush1.bf16.msra.mxu0 %v516
      %681 = vmatprep.subr.bf16.mxu0 0
      %682 = vmatpush1.bf16.msra.mxu0 %v517
      %683 = vmatprep.subr.bf16.mxu0 0
      %684 = vmatpush1.bf16.msra.mxu0 %v518
      %685 = vmatprep.subr.bf16.mxu0 0
      %686 = vmatpush1.bf16.msra.mxu0 0
      %687 = vmatprep.subr.bf16.mxu0 0
      %688 = vmatpush1.bf16.msra.mxu0 0
      %689 = vmatprep.subr.bf16.mxu0 0
      %690 = vmatpush1.bf16.msra.mxu0 0
      %691 = vmatprep.subr.bf16.mxu0 0
      %692 = vmatpush1.bf16.msra.mxu0 0
      %693 = vmatprep.subr.bf16.mxu0 0
      %694 = vmatpush1.bf16.msra.mxu0 0
      %695 = vmatprep.subr.bf16.mxu0 0
      %696 = vmatpush1.bf16.msra.mxu0 0
      %697 = vmatprep.subr.bf16.mxu0 0
      %698 = vmatpush1.bf16.msra.mxu0 0
      %699 = vmatprep.subr.bf16.mxu0 0
      %700 = vmatpush1.bf16.msra.mxu0 0
      %701 = vmatprep.subr.bf16.mxu0 0
      %702 = vmatpush1.bf16.msra.mxu0 0
      %703 = vmatprep.subr.bf16.mxu0 0
      %704 = vmatpush1.bf16.msra.mxu0 0
      %705 = vmatprep.subr.bf16.mxu0 0
      %706 = vmatpush1.bf16.msra.mxu0 0
      %707 = vmatprep.subr.bf16.mxu0 0
      %708 = vmatpush1.bf16.msra.mxu0 0
      %709 = vmatprep.mubr.bf16.mxu0 0
      %710 = vmatmul.mubr.bf16.gmra.mrb[0].mxu0 %v557
      %v711 = vpop.f32.mrb[0].mxu0
      %v712 = vadd.f32 %v656, %v711
      %v713 = vpop.f32.mrb[0].mxu0
      %v714 = vpop.f32.mrb[0].mxu0
      %v715 = vadd.f32 %v659, %v714
      %v716 = vpop.f32.mrb[0].mxu0
      %717 = vmatprep.mubr.bf16.mxu0 0
      %718 = vmatmul.mubr.bf16.gmra.mrb[0].mxu0 %v560
      %v719 = vpop.f32.mrb[0].mxu0
      %v720 = vadd.f32 %v664, %v719
      %v721 = vpop.f32.mrb[0].mxu0
      %v722 = vpop.f32.mrb[0].mxu0
      %v723 = vadd.f32 %v667, %v722
      %v724 = vpop.f32.mrb[0].mxu0
      %725 = vmatprep.mubr.bf16.mxu0 0
      %726 = vmatmul.mubr.bf16.gmra.mrb[0].mxu0 %v563
      %v727 = vpop.f32.mrb[0].mxu0
      %v728 = vadd.f32 %v672, %v727
      %v729 = vpop.f32.mrb[0].mxu0
      %v730 = vpop.f32.mrb[0].mxu0
      %v731 = vpop.f32.mrb[0].mxu0
      %732 = vdwg.mxu0
      %733 = vst.msk [vmem:[%s175] sm:$0xff] %vm555, %v712
      %734 = vst.msk [vmem:[%s175 + $0x8] sm:$0xff] %vm555, %v715
      %735 = vst.msk [vmem:[%s175 + $0x10] sm:$0xff] %vm555, %v720
      %736 = vst.msk [vmem:[%s175 + $0x18] sm:$0xff] %vm555, %v723
      %737 = vst.msk [vmem:[%s175 + $0x20] sm:$0xff] %vm555, %v728
      %s738 = smul.u32 5, %s14
      %p739 = scmp.lt.s32.totalorder %s738, 9
      %s740 = scalar_select %p739, %s738, 9
      %s741 = smul.addr %s740, 8
      %s742 = scalar_lea.vmem %s3, %s741
      // Predicated region
      $region33: #{decoder_forward.3} parent=31 // pred_check
        %p743 = pneg %p100
      $region34: #{decoder_forward.3} parent=31 // pred_check_branch
        %745 = sbr.rel (%p743) target = $region36
      $region35: #{decoder_forward.3} parent=31 // pred_region
        %s746 = smul.u32 5, %s14
      $region36: #{decoder_forward.3} parent=31 // pred_fallthru
        _
    $region32: #{decoder_forward.3} parent=5 // pred_fallthru
      _
    %p747 = scmp.le.s32.totalorder 2, %s9
    // Predicated region
    $region37: #{decoder_forward.3} parent=5 // pred_check
      %p748 = pneg %p747
    $region38: #{decoder_forward.3} parent=5 // pred_check_branch
      %750 = sbr.rel (%p748) target = $region40
    $region39: #{decoder_forward.3} parent=5 // pred_region
      %s751 = ssub.s32 %s9, 2
      // Predicated region
      $region41: #{decoder_forward.3} parent=39 // pred_check
        %p752 = pneg %p106
      $region42: #{decoder_forward.3} parent=39 // pred_check_branch
        %754 = sbr.rel (%p752) target = $region44
      $region43: #{decoder_forward.3} parent=39 // pred_region
        %s755 = smul.u32 5, %s15
        %p756 = scmp.lt.s32.totalorder %s755, 9
        %s757 = scalar_select %p756, %s755, 9
        %s758 = smul.addr %s757, 8
        %s759 = scalar_lea.vmem %s3, %s758
      $region44: #{decoder_forward.3} parent=39 // pred_fallthru
        _
    $region40: #{decoder_forward.3} parent=5 // pred_fallthru
      _
  $region6: #{decoder_forward.3} parent=0 // loop_footer
    %s13 = sadd.s32 1, %s9
  $region7: #{decoder_forward.3} parent=0 // loop_footer_branch
    %8 = sbr.rel target = $region3
  $region8: #{decoder_forward.3} parent=0 // loop_exit
    _

// kernel: tile.15
$region0: #{tile.15}
  #allocation0 [shape = 's32[1]{0}', space=sflag, size = 0x4, scoped, tag = 'scoped memory for tile.15']
  %s0 = inlined_call_operand.vmem [shape: f32[32], index: 0, kind: input, shape index: {}]
  %s1 = inlined_call_operand.vmem [shape: f32[4,32], index: 1, kind: output, shape index: {}]
  // Predicated region
  $region2: #{tile.15} parent=0 // pred_check
    _
  $region3: #{tile.15} parent=0 // pred_check_branch
    %3 = sbr.rel (0) target = $region5
  $region4: #{tile.15} parent=0 // pred_region
    _
  $region5: #{tile.15} parent=0 // pred_fallthru
    _
  %v4 = vld [vmem:[%s0] ss:$0 sm:$0xff]
  %5 = vst [vmem:[%s1] sm:$0xf] %v4

// kernel: tile.16
$region0: #{tile.16}
  %s0 = inlined_call_operand.vmem [shape: f32[4,32], index: 0, kind: input, shape index: {}]
  %s1 = inlined_call_operand.vmem [shape: f32[1,128], index: 1, kind: output, shape index: {}]
  $region1: #{tile.16} parent=0
    #allocation0 [shape = 'u8[4096]{0}', space=vmem, size = 0x1000, scoped, tag = 'scoped mem for output reshape']
    #allocation1 [shape = 'u8[4096]{0}', space=vmem, size = 0x1000, scoped, tag = 'scoped mem for input reshape']
    %s3 = sshllo.u32 0, 4
    %v4 = vld [vmem:[%s0] sm:%s3]
    %5 = vst [vmem:[#allocation1] sm:%s3] %v4
    %v6 = vld [vmem:[#allocation1] sm:$0x1]
    %vm7 = vcmask 261120
    %8 = vst.msk [vmem:[#allocation0] sm:$0x1] %vm7, %v6
    %s9 = scalar_lea.vmem [#allocation1], 3
    %v10 = vld [vmem:[%s9] sm:$0x1]
    %11 = vrot.lane.b32.xlu0 %v10, 96
    %v12 = vpop.permute.xlu0 %11
    %vm13 = vcmask 1048320
    %14 = vst.msk [vmem:[#allocation0] sm:$0x1] %vm13, %v12
    %s15 = scalar_lea.vmem [#allocation1], 2
    %v16 = vld [vmem:[%s15] sm:$0x1]
    %17 = vrot.lane.b32.xlu0 %v16, 64
    %v18 = vpop.permute.xlu0 %17
    %vm19 = vcmask 785920
    %20 = vst.msk [vmem:[#allocation0] sm:$0x1] %vm19, %v18
    %s21 = scalar_lea.vmem [#allocation1], 1
    %v22 = vld [vmem:[%s21] sm:$0x1]
    %23 = vrot.lane.b32.xlu0 %v22, 32
    %v24 = vpop.permute.xlu0 %23
    %vm25 = vcmask 523520
    %26 = vst.msk [vmem:[#allocation0] sm:$0x1] %vm25, %v24
    %s28 = sshllo.u32 0, 1
    %v30 = vld [vmem:[#allocation0] sm:%s28]
    %s31 = sshllo.u32 0, 1
    %32 = vst [vmem:[%s1] sm:%s31] %v30

// kernel: decoder_forward.4
$region0: #{decoder_forward.4}
  #allocation0 [shape = 'u32[]', space=smem, size = 0x4, offset = 0x4, fixed_abs, tag = 'smem constant byte address 0x4 - core index']
  #allocation1 [shape = 'u32[144,128]{1,0:T(1,128)}', space=vmem, size = 0x12000, scoped, tag = 'internal scratch']
  %s0 = inlined_call_operand.vmem [shape: bf16[112,256], index: 0, kind: input, shape index: {}]
  %s1 = inlined_call_operand.vmem [shape: bf16[256,128], index: 1, kind: input, shape index: {}]
  %s2 = inlined_call_operand.vmem [shape: f32[1,128], index: 2, kind: input, shape index: {}]
  %s3 = inlined_call_operand.vmem [shape: f32[112,128], index: 3, kind: output, shape index: {}]
  %s4 = sld [smem:[#allocation0]]
  $region45: #{decoder_forward.4} parent=0
    _
  %s6 = ssub.s32 1, %s4
  %s7 = scalar_select 0, %s6, %s4
  loop: start=0, step=1, limit=4
  $region2: #{decoder_forward.4} parent=0 // loop_pre_header
    _
  $region3: #{decoder_forward.4} parent=0 // loop_header
    %s9 = sphi 0, %s13
    %p10 = scmp.ge.s32.totalorder %s9, 4
    %s19 = sphi 0, %s21
    %s22 = sphi 0, %s19
    %s23 = sphi 0, %s22
    %s39 = sphi 0, %s23
    %s43 = sphi 0, %s43
    %s45 = sphi 0, %s43
    %s46 = sphi 0, %s45
    %s60 = sphi 0, %s46
    %s64 = sphi 0, %s64
    %s66 = sphi 0, %s64
    %s67 = sphi 0, %s66
    %s81 = sphi 0, %s67
    %s87 = sphi 0, %s89
    %s90 = sphi 0, %s87
    %s91 = sphi 0, %s90
    %s107 = sphi 0, %s91
  $region4: #{decoder_forward.4} parent=0 // loop_header_branch
    %12 = sbr.rel (%p10) target = $region8
  $region5: #{decoder_forward.4} parent=0 // loop_body
    %s14 = ssub.s32 %s9, 1
    %s15 = ssub.s32 %s9, 2
    %s16 = sadd.s32 %s9, 1
    %s17 = ssub.s32 %s9, %s16
    %p18 = scmp.eq.s32.totalorder %s17, 0
    %s20 = sadd.s32 %s19, 1
    %s21 = scalar_select %p18, %s19, %s20
    %p24 = pneg %p18
    %p25 = scmp.eq.s32.totalorder %s9, 1
    %p26 = por %p24, %p25
    %p27 = scmp.ne.s32.totalorder %s19, %s22
    %p28 = scmp.eq.s32.totalorder %s9, 0
    %p29 = por %p27, %p28
    %p30 = scmp.ne.s32.totalorder %s19, %s22
    %p31 = scmp.eq.s32.totalorder %s14, 1
    %p32 = por %p30, %p31
    %p33 = scmp.ne.s32.totalorder %s22, %s23
    %p34 = scmp.eq.s32.totalorder %s14, 0
    %p35 = por %p33, %p34
    %p36 = scmp.ne.s32.totalorder %s22, %s23
    %p37 = scmp.eq.s32.totalorder %s15, 1
    %p38 = por %p36, %p37
    %p40 = scmp.ne.s32.totalorder %s23, %s39
    %p41 = scmp.eq.s32.totalorder %s15, 0
    %p42 = por %p40, %p41
    %s44 = sadd.s32 %s43, 1
    %p47 = scmp.eq.s32.totalorder %s9, 1
    %p48 = scmp.ne.s32.totalorder %s43, %s45
    %p49 = scmp.eq.s32.totalorder %s9, 0
    %p50 = por %p48, %p49
    %p51 = scmp.ne.s32.totalorder %s43, %s45
    %p52 = scmp.eq.s32.totalorder %s14, 1
    %p53 = por %p51, %p52
    %p54 = scmp.ne.s32.totalorder %s45, %s46
    %p55 = scmp.eq.s32.totalorder %s14, 0
    %p56 = por %p54, %p55
    %p57 = scmp.ne.s32.totalorder %s45, %s46
    %p58 = scmp.eq.s32.totalorder %s15, 1
    %p59 = por %p57, %p58
    %p61 = scmp.ne.s32.totalorder %s46, %s60
    %p62 = scmp.eq.s32.totalorder %s15, 0
    %p63 = por %p61, %p62
    %s65 = sadd.s32 %s64, 1
    %p68 = scmp.eq.s32.totalorder %s9, 1
    %p69 = scmp.ne.s32.totalorder %s64, %s66
    %p70 = scmp.eq.s32.totalorder %s9, 0
    %p71 = por %p69, %p70
    %p72 = scmp.ne.s32.totalorder %s64, %s66
    %p73 = scmp.eq.s32.totalorder %s14, 1
    %p74 = por %p72, %p73
    %p75 = scmp.ne.s32.totalorder %s66, %s67
    %p76 = scmp.eq.s32.totalorder %s14, 0
    %p77 = por %p75, %p76
    %p78 = scmp.ne.s32.totalorder %s66, %s67
    %p79 = scmp.eq.s32.totalorder %s15, 1
    %p80 = por %p78, %p79
    %p82 = scmp.ne.s32.totalorder %s67, %s81
    %p83 = scmp.eq.s32.totalorder %s15, 0
    %p84 = por %p82, %p83
    %s85 = ssub.s32 %s9, %s16
    %p86 = scmp.eq.s32.totalorder %s85, 0
    %s88 = sadd.s32 %s87, 1
    %s89 = scalar_select %p86, %s87, %s88
    %p92 = pneg %p86
    %p93 = scmp.eq.s32.totalorder %s9, 1
    %p94 = por %p92, %p93
    %p95 = scmp.ne.s32.totalorder %s87, %s90
    %p96 = scmp.eq.s32.totalorder %s9, 0
    %p97 = por %p95, %p96
    %p98 = scmp.ne.s32.totalorder %s87, %s90
    %p99 = scmp.eq.s32.totalorder %s14, 1
    %p100 = por %p98, %p99
    %p101 = scmp.ne.s32.totalorder %s90, %s91
    %p102 = scmp.eq.s32.totalorder %s14, 0
    %p103 = por %p101, %p102
    %p104 = scmp.ne.s32.totalorder %s90, %s91
    %p105 = scmp.eq.s32.totalorder %s15, 1
    %p106 = por %p104, %p105
    %p108 = scmp.ne.s32.totalorder %s91, %s107
    %p109 = scmp.eq.s32.totalorder %s15, 0
    %p110 = por %p108, %p109
    %p111 = scmp.le.s32.totalorder 1, %s9
    %p112 = scmp.lt.s32.totalorder %s9, 3
    %p113 = pnand %p111, %p112
    %p114 = pneg %p113
    // Predicated region
    $region9: #{decoder_forward.4} parent=5 // pred_check
      _
    $region10: #{decoder_forward.4} parent=5 // pred_check_branch
      %116 = sbr.rel (%p113) target = $region12
    $region11: #{decoder_forward.4} parent=5 // pred_region
      %s117 = ssub.s32 %s9, 1
      // Predicated region
      $region13: #{decoder_forward.4} parent=11 // pred_check
        %p118 = pneg %p56
      $region14: #{decoder_forward.4} parent=11 // pred_check_branch
        %120 = sbr.rel (%p118) target = $region16
      $region15: #{decoder_forward.4} parent=11 // pred_region
        _
      $region16: #{decoder_forward.4} parent=11 // pred_fallthru
        _
      // Predicated region
      $region17: #{decoder_forward.4} parent=11 // pred_check
        %p121 = pneg %p77
      $region18: #{decoder_forward.4} parent=11 // pred_check_branch
        %123 = sbr.rel (%p121) target = $region20
      $region19: #{decoder_forward.4} parent=11 // pred_region
        _
      $region20: #{decoder_forward.4} parent=11 // pred_fallthru
        _
    $region12: #{decoder_forward.4} parent=5 // pred_fallthru
      _
    %p124 = scmp.lt.s32.totalorder %s9, 2
    // Predicated region
    $region21: #{decoder_forward.4} parent=5 // pred_check
      %p125 = pneg %p124
    $region22: #{decoder_forward.4} parent=5 // pred_check_branch
      %127 = sbr.rel (%p125) target = $region24
    $region23: #{decoder_forward.4} parent=5 // pred_region
      // Predicated region
      $region25: #{decoder_forward.4} parent=23 // pred_check
        %p128 = pneg %p29
      $region26: #{decoder_forward.4} parent=23 // pred_check_branch
        %130 = sbr.rel (%p128) target = $region28
      $region27: #{decoder_forward.4} parent=23 // pred_region
        %s131 = smul.u32 7, %s9
        %p132 = scmp.lt.s32.totalorder %s131, 13
        %s133 = scalar_select %p132, %s131, 13
        %s134 = smul.addr %s133, 2
        %s135 = smul.addr %s134, 4
        %s136 = scalar_lea.vmem %s0, %s135
        %s137 = smul.u32 7, %s9
      $region28: #{decoder_forward.4} parent=23 // pred_fallthru
        _
    $region24: #{decoder_forward.4} parent=5 // pred_fallthru
      _
    %p138 = scmp.le.s32.totalorder 1, %s9
    %p139 = scmp.lt.s32.totalorder %s9, 3
    %p140 = pnand %p138, %p139
    %p141 = pneg %p140
    // Predicated region
    $region29: #{decoder_forward.4} parent=5 // pred_check
      _
    $region30: #{decoder_forward.4} parent=5 // pred_check_branch
      %143 = sbr.rel (%p140) target = $region32
    $region31: #{decoder_forward.4} parent=5 // pred_region
      %s144 = ssub.s32 %s9, 1
      %s145 = smul.u32 7, %s14
      %p146 = scmp.lt.s32.totalorder %s145, 13
      %s147 = scalar_select %p146, %s145, 13
      %s148 = smul.addr %s147, 2
      %s149 = smul.addr %s148, 4
      %s150 = scalar_lea.vmem %s0, %s149
      %p151 = pneg %p35
      %p152 = pneg %p32
      %p153 = pneg %p56
      %p154 = pneg %p53
      %p155 = pneg %p77
      %p156 = pneg %p74
      %p157 = pneg %p103
      %p158 = pneg %p100
      %s159 = smul.u32 7, %s14
      %p160 = scmp.lt.s32.totalorder %s159, 13
      %s161 = scalar_select %p160, %s159, 13
      %s162 = smul.addr %s161, 8
      %s163 = scalar_lea.vmem %s3, %s162
      %s164 = smul.u32 7, %s14
      %p165 = scmp.lt.s32.totalorder %s164, 13
      %s166 = scalar_select %p165, %s164, 13
      %s167 = smul.addr %s166, 2
      %s168 = smul.addr %s167, 4
      %s169 = scalar_lea.vmem %s0, %s168
      %s170 = smul.u32 7, %s14
      %s171 = smul.u32 7, %s14
      %p172 = scmp.lt.s32.totalorder %s171, 13
      %s173 = scalar_select %p172, %s171, 13
      %s174 = smul.addr %s173, 8
      %s175 = scalar_lea.vmem %s3, %s174
      %s176 = smul.u32 7, %s14
      %v178 = vld [vmem:[%s169] sm:$0xff]
      %v179 = vld [vmem:[%s169 + $0x8] sm:$0xff]
      %v180 = vld [vmem:[%s169 + $0x10] sm:$0xff]
      %v181 = vld [vmem:[%s169 + $0x18] sm:$0xff]
      %v182 = vld [vmem:[%s169 + $0x20] sm:$0xff]
      %v183 = vld [vmem:[%s169 + $0x28] sm:$0xff]
      %v184 = vld [vmem:[%s169 + $0x30] sm:$0xff]
      %v185 = vld [vmem:[%s1] sm:$0xf]
      %v186 = vld [vmem:[%s1 + $0x4] sm:$0xf]
      %v187 = vld [vmem:[%s1 + $0x8] sm:$0xf]
      %v188 = vld [vmem:[%s1 + $0xc] sm:$0xf]
      %v189 = vld [vmem:[%s1 + $0x10] sm:$0xf]
      %v190 = vld [vmem:[%s1 + $0x14] sm:$0xf]
      %v191 = vld [vmem:[%s1 + $0x18] sm:$0xf]
      %v192 = vld [vmem:[%s1 + $0x1c] sm:$0xf]
      %v193 = vld [vmem:[%s1 + $0x20] sm:$0xf]
      %v194 = vld [vmem:[%s1 + $0x24] sm:$0xf]
      %v195 = vld [vmem:[%s1 + $0x28] sm:$0xf]
      %v196 = vld [vmem:[%s1 + $0x2c] sm:$0xf]
      %v197 = vld [vmem:[%s1 + $0x30] sm:$0xf]
      %v198 = vld [vmem:[%s1 + $0x34] sm:$0xf]
      %v199 = vld [vmem:[%s1 + $0x38] sm:$0xf]
      %v200 = vld [vmem:[%s1 + $0x3c] sm:$0xf]
      %v201 = vld [vmem:[%s1 + $0x40] sm:$0xf]
      %v202 = vld [vmem:[%s1 + $0x44] sm:$0xf]
      %v203 = vld [vmem:[%s1 + $0x48] sm:$0xf]
      %v204 = vld [vmem:[%s1 + $0x4c] sm:$0xf]
      %v205 = vld [vmem:[%s1 + $0x50] sm:$0xf]
      %v206 = vld [vmem:[%s1 + $0x54] sm:$0xf]
      %v207 = vld [vmem:[%s1 + $0x58] sm:$0xf]
      %v208 = vld [vmem:[%s1 + $0x5c] sm:$0xf]
      %v209 = vld [vmem:[%s1 + $0x60] sm:$0xf]
      %v210 = vld [vmem:[%s1 + $0x64] sm:$0xf]
      %v211 = vld [vmem:[%s1 + $0x68] sm:$0xf]
      %v212 = vld [vmem:[%s1 + $0x6c] sm:$0xf]
      %v213 = vld [vmem:[%s1 + $0x70] sm:$0xf]
      %v214 = vld [vmem:[%s1 + $0x74] sm:$0xf]
      %v215 = vld [vmem:[%s1 + $0x78] sm:$0xf]
      %v216 = vld [vmem:[%s1 + $0x7c] sm:$0xf]
      %v217 = vld [vmem:[%s2] sm:$0x1]
      %v219 = vlaneseq
      %v220 = vshrl.u32 %v219, 7
      %v221 = vsub.s32 0, %v220
      %v222 = vrot.slane %v217, %v221
      %v231 = vunpack.c.l.b16 %v178
      %v232 = vunpack.c.h.b16 %v178
      %v233 = vunpack.c.l.b16 %v179
      %v234 = vunpack.c.h.b16 %v179
      %v235 = vunpack.c.l.b16 %v180
      %v236 = vunpack.c.h.b16 %v180
      %v237 = vunpack.c.l.b16 %v181
      %v238 = vunpack.c.h.b16 %v181
      %v239 = vunpack.c.l.b16 %v182
      %v240 = vunpack.c.h.b16 %v182
      %v241 = vunpack.c.l.b16 %v183
      %v242 = vunpack.c.h.b16 %v183
      %v243 = vunpack.c.l.b16 %v184
      %v244 = vunpack.c.h.b16 %v184
      %v245 = vpack.c.b16 %v233, %v231
      %v246 = vpack.c.b16 %v234, %v232
      %v247 = vpack.c.b16 %v237, %v235
      %v248 = vpack.c.b16 %v238, %v236
      %v249 = vpack.c.b16 %v241, %v239
      %v250 = vpack.c.b16 %v242, %v240
      %v251 = vpack.c.b16 %v243, %v243
      %v252 = vpack.c.b16 %v244, %v244
      %v293 = vunpack.c.l.b16 %v185
      %v294 = vunpack.c.l.b16 %v186
      %v295 = vunpack.c.l.b16 %v187
      %v296 = vunpack.c.l.b16 %v188
      %v297 = vunpack.c.l.b16 %v189
      %v298 = vunpack.c.l.b16 %v190
      %v299 = vunpack.c.l.b16 %v191
      %v300 = vunpack.c.l.b16 %v192
      %v301 = vunpack.c.l.b16 %v193
      %v302 = vunpack.c.l.b16 %v194
      %v303 = vunpack.c.l.b16 %v195
      %v304 = vunpack.c.l.b16 %v196
      %v305 = vunpack.c.l.b16 %v197
      %v306 = vunpack.c.l.b16 %v198
      %v307 = vunpack.c.l.b16 %v199
      %v308 = vunpack.c.l.b16 %v200
      %v309 = vunpack.c.l.b16 %v201
      %v310 = vunpack.c.l.b16 %v202
      %v311 = vunpack.c.l.b16 %v203
      %v312 = vunpack.c.l.b16 %v204
      %v313 = vunpack.c.l.b16 %v205
      %v314 = vunpack.c.l.b16 %v206
      %v315 = vunpack.c.l.b16 %v207
      %v316 = vunpack.c.l.b16 %v208
      %v317 = vunpack.c.l.b16 %v209
      %v318 = vunpack.c.l.b16 %v210
      %v319 = vunpack.c.l.b16 %v211
      %v320 = vunpack.c.l.b16 %v212
      %v321 = vunpack.c.l.b16 %v213
      %v322 = vunpack.c.l.b16 %v214
      %v323 = vunpack.c.l.b16 %v215
      %v324 = vunpack.c.l.b16 %v216
      %v325 = vpack.c.b16 %v294, %v293
      %v326 = vpack.c.b16 %v296, %v295
      %v327 = vpack.c.b16 %v298, %v297
      %v328 = vpack.c.b16 %v300, %v299
      %v329 = vpack.c.b16 %v302, %v301
      %v330 = vpack.c.b16 %v304, %v303
      %v331 = vpack.c.b16 %v306, %v305
      %v332 = vpack.c.b16 %v308, %v307
      %v333 = vpack.c.b16 %v310, %v309
      %v334 = vpack.c.b16 %v312, %v311
      %v335 = vpack.c.b16 %v314, %v313
      %v336 = vpack.c.b16 %v316, %v315
      %v337 = vpack.c.b16 %v318, %v317
      %v338 = vpack.c.b16 %v320, %v319
      %v339 = vpack.c.b16 %v322, %v321
      %v340 = vpack.c.b16 %v324, %v323
      %357 = vmatprep.subr.bf16.mxu0 0
      %358 = vmatpush1.bf16.msra.mxu0 %v325
      %359 = vmatprep.subr.bf16.mxu0 0
      %360 = vmatpush1.bf16.msra.mxu0 %v326
      %361 = vmatprep.subr.bf16.mxu0 0
      %362 = vmatpush1.bf16.msra.mxu0 %v327
      %363 = vmatprep.subr.bf16.mxu0 0
      %364 = vmatpush1.bf16.msra.mxu0 %v328
      %365 = vmatprep.subr.bf16.mxu0 0
      %366 = vmatpush1.bf16.msra.mxu0 %v329
      %367 = vmatprep.subr.bf16.mxu0 0
      %368 = vmatpush1.bf16.msra.mxu0 %v330
      %369 = vmatprep.subr.bf16.mxu0 0
      %370 = vmatpush1.bf16.msra.mxu0 %v331
      %371 = vmatprep.subr.bf16.mxu0 0
      %372 = vmatpush1.bf16.msra.mxu0 %v332
      %373 = vmatprep.subr.bf16.mxu0 0
      %374 = vmatpush1.bf16.msra.mxu0 %v333
      %375 = vmatprep.subr.bf16.mxu0 0
      %376 = vmatpush1.bf16.msra.mxu0 %v334
      %377 = vmatprep.subr.bf16.mxu0 0
      %378 = vmatpush1.bf16.msra.mxu0 %v335
      %379 = vmatprep.subr.bf16.mxu0 0
      %380 = vmatpush1.bf16.msra.mxu0 %v336
      %381 = vmatprep.subr.bf16.mxu0 0
      %382 = vmatpush1.bf16.msra.mxu0 %v337
      %383 = vmatprep.subr.bf16.mxu0 0
      %384 = vmatpush1.bf16.msra.mxu0 %v338
      %385 = vmatprep.subr.bf16.mxu0 0
      %386 = vmatpush1.bf16.msra.mxu0 %v339
      %387 = vmatprep.subr.bf16.mxu0 0
      %388 = vmatpush1.bf16.msra.mxu0 %v340
      %389 = vmatprep.mubr.bf16.mxu0 %v246
      %390 = vmatmul.mubr.bf16.gmra.mrb[0].mxu0 %v245
      %v391 = vpop.f32.mrb[0].mxu0
      %v392 = vadd.f32 %v222, %v391
      %v393 = vpop.f32.mrb[0].mxu0
      %v394 = vpop.f32.mrb[0].mxu0
      %v395 = vadd.f32 %v222, %v394
      %v396 = vpop.f32.mrb[0].mxu0
      %397 = vmatprep.mubr.bf16.mxu0 %v248
      %398 = vmatmul.mubr.bf16.gmra.mrb[0].mxu0 %v247
      %v399 = vpop.f32.mrb[0].mxu0
      %v400 = vadd.f32 %v222, %v399
      %v401 = vpop.f32.mrb[0].mxu0
      %v402 = vpop.f32.mrb[0].mxu0
      %v403 = vadd.f32 %v222, %v402
      %v404 = vpop.f32.mrb[0].mxu0
      %405 = vmatprep.mubr.bf16.mxu0 %v250
      %406 = vmatmul.mubr.bf16.gmra.mrb[0].mxu0 %v249
      %v407 = vpop.f32.mrb[0].mxu0
      %v408 = vadd.f32 %v222, %v407
      %v409 = vpop.f32.mrb[0].mxu0
      %v410 = vpop.f32.mrb[0].mxu0
      %v411 = vadd.f32 %v222, %v410
      %v412 = vpop.f32.mrb[0].mxu0
      %413 = vmatprep.mubr.bf16.mxu0 %v252
      %414 = vmatmul.mubr.bf16.gmra.mrb[0].mxu0 %v251
      %v415 = vpop.f32.mrb[0].mxu0
      %v416 = vadd.f32 %v222, %v415
      %v417 = vpop.f32.mrb[0].mxu0
      %v418 = vpop.f32.mrb[0].mxu0
      %v419 = vpop.f32.mrb[0].mxu0
      %420 = vdwg.mxu0
      %421 = vst [vmem:[%s175] sm:$0xff] %v392
      %422 = vst [vmem:[%s175 + $0x8] sm:$0xff] %v395
      %423 = vst [vmem:[%s175 + $0x10] sm:$0xff] %v400
      %424 = vst [vmem:[%s175 + $0x18] sm:$0xff] %v403
      %425 = vst [vmem:[%s175 + $0x20] sm:$0xff] %v408
      %426 = vst [vmem:[%s175 + $0x28] sm:$0xff] %v411
      %427 = vst [vmem:[%s175 + $0x30] sm:$0xff] %v416
      %s428 = smul.u32 7, %s14
      %p429 = scmp.lt.s32.totalorder %s428, 13
      %s430 = scalar_select %p429, %s428, 13
      %s431 = smul.addr %s430, 8
      %s432 = scalar_lea.vmem %s3, %s431
      // Predicated region
      $region33: #{decoder_forward.4} parent=31 // pred_check
        %p433 = pneg %p100
      $region34: #{decoder_forward.4} parent=31 // pred_check_branch
        %435 = sbr.rel (%p433) target = $region36
      $region35: #{decoder_forward.4} parent=31 // pred_region
        %s436 = smul.u32 7, %s14
      $region36: #{decoder_forward.4} parent=31 // pred_fallthru
        _
    $region32: #{decoder_forward.4} parent=5 // pred_fallthru
      _
    %p437 = scmp.le.s32.totalorder 2, %s9
    // Predicated region
    $region37: #{decoder_forward.4} parent=5 // pred_check
      %p438 = pneg %p437
    $region38: #{decoder_forward.4} parent=5 // pred_check_branch
      %440 = sbr.rel (%p438) target = $region40
    $region39: #{decoder_forward.4} parent=5 // pred_region
      %s441 = ssub.s32 %s9, 2
      // Predicated region
      $region41: #{decoder_forward.4} parent=39 // pred_check
        %p442 = pneg %p106
      $region42: #{decoder_forward.4} parent=39 // pred_check_branch
        %444 = sbr.rel (%p442) target = $region44
      $region43: #{decoder_forward.4} parent=39 // pred_region
        %s445 = smul.u32 7, %s15
        %p446 = scmp.lt.s32.totalorder %s445, 13
        %s447 = scalar_select %p446, %s445, 13
        %s448 = smul.addr %s447, 8
        %s449 = scalar_lea.vmem %s3, %s448
      $region44: #{decoder_forward.4} parent=39 // pred_fallthru
        _
    $region40: #{decoder_forward.4} parent=5 // pred_fallthru
      _
  $region6: #{decoder_forward.4} parent=0 // loop_footer
    %s13 = sadd.s32 1, %s9
  $region7: #{decoder_forward.4} parent=0 // loop_footer_branch
    %8 = sbr.rel target = $region3
  $region8: #{decoder_forward.4} parent=0 // loop_exit
    _

// kernel: decoder_forward.5
$region0: #{decoder_forward.5}
  #allocation0 [shape = 'u32[]', space=smem, size = 0x4, offset = 0x4, fixed_abs, tag = 'smem constant byte address 0x4 - core index']
  #allocation1 [shape = 'u32[144,128]{1,0:T(1,128)}', space=vmem, size = 0x12000, scoped, tag = 'internal scratch']
  %s0 = inlined_call_operand.vmem [shape: bf16[464,128], index: 0, kind: input, shape index: {}]
  %s1 = inlined_call_operand.vmem [shape: bf16[128,16], index: 1, kind: input, shape index: {}]
  %s2 = inlined_call_operand.vmem [shape: f32[1,16], index: 2, kind: input, shape index: {}]
  %s3 = inlined_call_operand.vmem [shape: f32[464,16], index: 3, kind: output, shape index: {}]
  %s4 = sld [smem:[#allocation0]]
  $region45: #{decoder_forward.5} parent=0
    _
  %s6 = ssub.s32 1, %s4
  %s7 = scalar_select 0, %s6, %s4
  loop: start=0, step=1, limit=4
  $region2: #{decoder_forward.5} parent=0 // loop_pre_header
    _
  $region3: #{decoder_forward.5} parent=0 // loop_header
    %s9 = sphi 0, %s13
    %p10 = scmp.ge.s32.totalorder %s9, 4
    %s19 = sphi 0, %s21
    %s22 = sphi 0, %s19
    %s23 = sphi 0, %s22
    %s39 = sphi 0, %s23
    %s43 = sphi 0, %s43
    %s45 = sphi 0, %s43
    %s46 = sphi 0, %s45
    %s60 = sphi 0, %s46
    %s64 = sphi 0, %s64
    %s66 = sphi 0, %s64
    %s67 = sphi 0, %s66
    %s81 = sphi 0, %s67
    %s87 = sphi 0, %s89
    %s90 = sphi 0, %s87
    %s91 = sphi 0, %s90
    %s107 = sphi 0, %s91
  $region4: #{decoder_forward.5} parent=0 // loop_header_branch
    %12 = sbr.rel (%p10) target = $region8
  $region5: #{decoder_forward.5} parent=0 // loop_body
    %s14 = ssub.s32 %s9, 1
    %s15 = ssub.s32 %s9, 2
    %s16 = sadd.s32 %s9, 1
    %s17 = ssub.s32 %s9, %s16
    %p18 = scmp.eq.s32.totalorder %s17, 0
    %s20 = sadd.s32 %s19, 1
    %s21 = scalar_select %p18, %s19, %s20
    %p24 = pneg %p18
    %p25 = scmp.eq.s32.totalorder %s9, 1
    %p26 = por %p24, %p25
    %p27 = scmp.ne.s32.totalorder %s19, %s22
    %p28 = scmp.eq.s32.totalorder %s9, 0
    %p29 = por %p27, %p28
    %p30 = scmp.ne.s32.totalorder %s19, %s22
    %p31 = scmp.eq.s32.totalorder %s14, 1
    %p32 = por %p30, %p31
    %p33 = scmp.ne.s32.totalorder %s22, %s23
    %p34 = scmp.eq.s32.totalorder %s14, 0
    %p35 = por %p33, %p34
    %p36 = scmp.ne.s32.totalorder %s22, %s23
    %p37 = scmp.eq.s32.totalorder %s15, 1
    %p38 = por %p36, %p37
    %p40 = scmp.ne.s32.totalorder %s23, %s39
    %p41 = scmp.eq.s32.totalorder %s15, 0
    %p42 = por %p40, %p41
    %s44 = sadd.s32 %s43, 1
    %p47 = scmp.eq.s32.totalorder %s9, 1
    %p48 = scmp.ne.s32.totalorder %s43, %s45
    %p49 = scmp.eq.s32.totalorder %s9, 0
    %p50 = por %p48, %p49
    %p51 = scmp.ne.s32.totalorder %s43, %s45
    %p52 = scmp.eq.s32.totalorder %s14, 1
    %p53 = por %p51, %p52
    %p54 = scmp.ne.s32.totalorder %s45, %s46
    %p55 = scmp.eq.s32.totalorder %s14, 0
    %p56 = por %p54, %p55
    %p57 = scmp.ne.s32.totalorder %s45, %s46
    %p58 = scmp.eq.s32.totalorder %s15, 1
    %p59 = por %p57, %p58
    %p61 = scmp.ne.s32.totalorder %s46, %s60
    %p62 = scmp.eq.s32.totalorder %s15, 0
    %p63 = por %p61, %p62
    %s65 = sadd.s32 %s64, 1
    %p68 = scmp.eq.s32.totalorder %s9, 1
    %p69 = scmp.ne.s32.totalorder %s64, %s66
    %p70 = scmp.eq.s32.totalorder %s9, 0
    %p71 = por %p69, %p70
    %p72 = scmp.ne.s32.totalorder %s64, %s66
    %p73 = scmp.eq.s32.totalorder %s14, 1
    %p74 = por %p72, %p73
    %p75 = scmp.ne.s32.totalorder %s66, %s67
    %p76 = scmp.eq.s32.totalorder %s14, 0
    %p77 = por %p75, %p76
    %p78 = scmp.ne.s32.totalorder %s66, %s67
    %p79 = scmp.eq.s32.totalorder %s15, 1
    %p80 = por %p78, %p79
    %p82 = scmp.ne.s32.totalorder %s67, %s81
    %p83 = scmp.eq.s32.totalorder %s15, 0
    %p84 = por %p82, %p83
    %s85 = ssub.s32 %s9, %s16
    %p86 = scmp.eq.s32.totalorder %s85, 0
    %s88 = sadd.s32 %s87, 1
    %s89 = scalar_select %p86, %s87, %s88
    %p92 = pneg %p86
    %p93 = scmp.eq.s32.totalorder %s9, 1
    %p94 = por %p92, %p93
    %p95 = scmp.ne.s32.totalorder %s87, %s90
    %p96 = scmp.eq.s32.totalorder %s9, 0
    %p97 = por %p95, %p96
    %p98 = scmp.ne.s32.totalorder %s87, %s90
    %p99 = scmp.eq.s32.totalorder %s14, 1
    %p100 = por %p98, %p99
    %p101 = scmp.ne.s32.totalorder %s90, %s91
    %p102 = scmp.eq.s32.totalorder %s14, 0
    %p103 = por %p101, %p102
    %p104 = scmp.ne.s32.totalorder %s90, %s91
    %p105 = scmp.eq.s32.totalorder %s15, 1
    %p106 = por %p104, %p105
    %p108 = scmp.ne.s32.totalorder %s91, %s107
    %p109 = scmp.eq.s32.totalorder %s15, 0
    %p110 = por %p108, %p109
    %p111 = scmp.le.s32.totalorder 1, %s9
    %p112 = scmp.lt.s32.totalorder %s9, 3
    %p113 = pnand %p111, %p112
    %p114 = pneg %p113
    // Predicated region
    $region9: #{decoder_forward.5} parent=5 // pred_check
      _
    $region10: #{decoder_forward.5} parent=5 // pred_check_branch
      %116 = sbr.rel (%p113) target = $region12
    $region11: #{decoder_forward.5} parent=5 // pred_region
      %s117 = ssub.s32 %s9, 1
      // Predicated region
      $region13: #{decoder_forward.5} parent=11 // pred_check
        %p118 = pneg %p56
      $region14: #{decoder_forward.5} parent=11 // pred_check_branch
        %120 = sbr.rel (%p118) target = $region16
      $region15: #{decoder_forward.5} parent=11 // pred_region
        _
      $region16: #{decoder_forward.5} parent=11 // pred_fallthru
        _
      // Predicated region
      $region17: #{decoder_forward.5} parent=11 // pred_check
        %p121 = pneg %p77
      $region18: #{decoder_forward.5} parent=11 // pred_check_branch
        %123 = sbr.rel (%p121) target = $region20
      $region19: #{decoder_forward.5} parent=11 // pred_region
        _
      $region20: #{decoder_forward.5} parent=11 // pred_fallthru
        _
    $region12: #{decoder_forward.5} parent=5 // pred_fallthru
      _
    %p124 = scmp.lt.s32.totalorder %s9, 2
    // Predicated region
    $region21: #{decoder_forward.5} parent=5 // pred_check
      %p125 = pneg %p124
    $region22: #{decoder_forward.5} parent=5 // pred_check_branch
      %127 = sbr.rel (%p125) target = $region24
    $region23: #{decoder_forward.5} parent=5 // pred_region
      // Predicated region
      $region25: #{decoder_forward.5} parent=23 // pred_check
        %p128 = pneg %p29
      $region26: #{decoder_forward.5} parent=23 // pred_check_branch
        %130 = sbr.rel (%p128) target = $region28
      $region27: #{decoder_forward.5} parent=23 // pred_region
        %s131 = smul.u32 29, %s9
        %p132 = scmp.lt.s32.totalorder %s131, 57
        %s133 = scalar_select %p132, %s131, 57
        %s134 = smul.addr %s133, 4
        %s135 = scalar_lea.vmem %s0, %s134
        %s136 = smul.u32 29, %s9
      $region28: #{decoder_forward.5} parent=23 // pred_fallthru
        _
    $region24: #{decoder_forward.5} parent=5 // pred_fallthru
      _
    %p137 = scmp.le.s32.totalorder 1, %s9
    %p138 = scmp.lt.s32.totalorder %s9, 3
    %p139 = pnand %p137, %p138
    %p140 = pneg %p139
    // Predicated region
    $region29: #{decoder_forward.5} parent=5 // pred_check
      _
    $region30: #{decoder_forward.5} parent=5 // pred_check_branch
      %142 = sbr.rel (%p139) target = $region32
    $region31: #{decoder_forward.5} parent=5 // pred_region
      %s143 = ssub.s32 %s9, 1
      %s144 = smul.u32 29, %s14
      %p145 = scmp.lt.s32.totalorder %s144, 57
      %s146 = scalar_select %p145, %s144, 57
      %s147 = smul.addr %s146, 4
      %s148 = scalar_lea.vmem %s0, %s147
      %p149 = pneg %p35
      %p150 = pneg %p32
      %p151 = pneg %p56
      %p152 = pneg %p53
      %p153 = pneg %p77
      %p154 = pneg %p74
      %p155 = pneg %p103
      %p156 = pneg %p100
      %s157 = smul.u32 29, %s14
      %p158 = scmp.lt.s32.totalorder %s157, 57
      %s159 = scalar_select %p158, %s157, 57
      %s160 = smul.addr %s159, 8
      %s161 = scalar_lea.vmem %s3, %s160
      %s162 = smul.u32 29, %s14
      %p163 = scmp.lt.s32.totalorder %s162, 57
      %s164 = scalar_select %p163, %s162, 57
      %s165 = smul.addr %s164, 4
      %s166 = scalar_lea.vmem %s0, %s165
      %s167 = smul.u32 29, %s14
      %s168 = smul.u32 29, %s14
      %p169 = scmp.lt.s32.totalorder %s168, 57
      %s170 = scalar_select %p169, %s168, 57
      %s171 = smul.addr %s170, 8
      %s172 = scalar_lea.vmem %s3, %s171
      %s173 = smul.u32 29, %s14
      %v175 = vld [vmem:[%s166] sm:$0xf]
      %v176 = vld [vmem:[%s166 + $0x4] sm:$0xf]
      %v177 = vld [vmem:[%s166 + $0x8] sm:$0xf]
      %v178 = vld [vmem:[%s166 + $0xc] sm:$0xf]
      %v179 = vld [vmem:[%s166 + $0x10] sm:$0xf]
      %v180 = vld [vmem:[%s166 + $0x14] sm:$0xf]
      %v181 = vld [vmem:[%s166 + $0x18] sm:$0xf]
      %v182 = vld [vmem:[%s166 + $0x1c] sm:$0xf]
      %v183 = vld [vmem:[%s166 + $0x20] sm:$0xf]
      %v184 = vld [vmem:[%s166 + $0x24] sm:$0xf]
      %v185 = vld [vmem:[%s166 + $0x28] sm:$0xf]
      %v186 = vld [vmem:[%s166 + $0x2c] sm:$0xf]
      %v187 = vld [vmem:[%s166 + $0x30] sm:$0xf]
      %v188 = vld [vmem:[%s166 + $0x34] sm:$0xf]
      %v189 = vld [vmem:[%s166 + $0x38] sm:$0xf]
      %v190 = vld [vmem:[%s166 + $0x3c] sm:$0xf]
      %v191 = vld [vmem:[%s166 + $0x40] sm:$0xf]
      %v192 = vld [vmem:[%s166 + $0x44] sm:$0xf]
      %v193 = vld [vmem:[%s166 + $0x48] sm:$0xf]
      %v194 = vld [vmem:[%s166 + $0x4c] sm:$0xf]
      %v195 = vld [vmem:[%s166 + $0x50] sm:$0xf]
      %v196 = vld [vmem:[%s166 + $0x54] sm:$0xf]
      %v197 = vld [vmem:[%s166 + $0x58] sm:$0xf]
      %v198 = vld [vmem:[%s166 + $0x5c] sm:$0xf]
      %v199 = vld [vmem:[%s166 + $0x60] sm:$0xf]
      %v200 = vld [vmem:[%s166 + $0x64] sm:$0xf]
      %v201 = vld [vmem:[%s166 + $0x68] sm:$0xf]
      %v202 = vld [vmem:[%s166 + $0x6c] sm:$0xf]
      %v203 = vld [vmem:[%s166 + $0x70] sm:$0xf]
      %v204 = vld [vmem:[%s1] sm:$0xf]
      %v205 = vld [vmem:[%s1 + $0x4] sm:$0xf]
      %v206 = vld [vmem:[%s1 + $0x8] sm:$0xf]
      %v207 = vld [vmem:[%s1 + $0xc] sm:$0xf]
      %v208 = vld [vmem:[%s1 + $0x10] sm:$0xf]
      %v209 = vld [vmem:[%s1 + $0x14] sm:$0xf]
      %v210 = vld [vmem:[%s1 + $0x18] sm:$0xf]
      %v211 = vld [vmem:[%s1 + $0x1c] sm:$0xf]
      %v212 = vld [vmem:[%s1 + $0x20] sm:$0xf]
      %v213 = vld [vmem:[%s1 + $0x24] sm:$0xf]
      %v214 = vld [vmem:[%s1 + $0x28] sm:$0xf]
      %v215 = vld [vmem:[%s1 + $0x2c] sm:$0xf]
      %v216 = vld [vmem:[%s1 + $0x30] sm:$0xf]
      %v217 = vld [vmem:[%s1 + $0x34] sm:$0xf]
      %v218 = vld [vmem:[%s1 + $0x38] sm:$0xf]
      %v219 = vld [vmem:[%s1 + $0x3c] sm:$0xf]
      %v220 = vld [vmem:[%s2] sm:$0x1]
      %v222 = vlaneseq
      %v223 = vshrl.u32 %v222, 7
      %v224 = vsub.s32 0, %v223
      %v225 = vrot.slane %v220, %v224
      %v256 = vunpack.c.l.b16 %v175
      %v257 = vunpack.c.l.b16 %v176
      %v258 = vunpack.c.l.b16 %v177
      %v259 = vunpack.c.l.b16 %v178
      %v260 = vunpack.c.l.b16 %v179
      %v261 = vunpack.c.l.b16 %v180
      %v262 = vunpack.c.l.b16 %v181
      %v263 = vunpack.c.l.b16 %v182
      %v264 = vunpack.c.l.b16 %v183
      %v265 = vunpack.c.l.b16 %v184
      %v266 = vunpack.c.l.b16 %v185
      %v267 = vunpack.c.l.b16 %v186
      %v268 = vunpack.c.l.b16 %v187
      %v269 = vunpack.c.l.b16 %v188
      %v270 = vunpack.c.l.b16 %v189
      %v271 = vunpack.c.l.b16 %v190
      %v272 = vunpack.c.l.b16 %v191
      %v273 = vunpack.c.l.b16 %v192
      %v274 = vunpack.c.l.b16 %v193
      %v275 = vunpack.c.l.b16 %v194
      %v276 = vunpack.c.l.b16 %v195
      %v277 = vunpack.c.l.b16 %v196
      %v278 = vunpack.c.l.b16 %v197
      %v279 = vunpack.c.l.b16 %v198
      %v280 = vunpack.c.l.b16 %v199
      %v281 = vunpack.c.l.b16 %v200
      %v282 = vunpack.c.l.b16 %v201
      %v283 = vunpack.c.l.b16 %v202
      %v284 = vunpack.c.l.b16 %v203
      %v285 = vpack.c.b16 %v257, %v256
      %v286 = vpack.c.b16 %v259, %v258
      %v287 = vpack.c.b16 %v261, %v260
      %v288 = vpack.c.b16 %v263, %v262
      %v289 = vpack.c.b16 %v265, %v264
      %v290 = vpack.c.b16 %v267, %v266
      %v291 = vpack.c.b16 %v269, %v268
      %v292 = vpack.c.b16 %v271, %v270
      %v293 = vpack.c.b16 %v273, %v272
      %v294 = vpack.c.b16 %v275, %v274
      %v295 = vpack.c.b16 %v277, %v276
      %v296 = vpack.c.b16 %v279, %v278
      %v297 = vpack.c.b16 %v281, %v280
      %v298 = vpack.c.b16 %v283, %v282
      %v299 = vpack.c.b16 %v284, %v284
      %v331 = vunpack.c.l.b16 %v204
      %v332 = vunpack.c.l.b16 %v205
      %v333 = vunpack.c.l.b16 %v206
      %v334 = vunpack.c.l.b16 %v207
      %v335 = vunpack.c.l.b16 %v208
      %v336 = vunpack.c.l.b16 %v209
      %v337 = vunpack.c.l.b16 %v210
      %v338 = vunpack.c.l.b16 %v211
      %v339 = vunpack.c.l.b16 %v212
      %v340 = vunpack.c.l.b16 %v213
      %v341 = vunpack.c.l.b16 %v214
      %v342 = vunpack.c.l.b16 %v215
      %v343 = vunpack.c.l.b16 %v216
      %v344 = vunpack.c.l.b16 %v217
      %v345 = vunpack.c.l.b16 %v218
      %v346 = vunpack.c.l.b16 %v219
      %v347 = vpack.c.b16 %v332, %v331
      %v348 = vpack.c.b16 %v334, %v333
      %v349 = vpack.c.b16 %v336, %v335
      %v350 = vpack.c.b16 %v338, %v337
      %v351 = vpack.c.b16 %v340, %v339
      %v352 = vpack.c.b16 %v342, %v341
      %v353 = vpack.c.b16 %v344, %v343
      %v354 = vpack.c.b16 %v346, %v345
      %363 = vmatprep.subr.bf16.mxu0 0
      %364 = vmatpush1.bf16.msra.mxu0 %v347
      %365 = vmatprep.subr.bf16.mxu0 0
      %366 = vmatpush1.bf16.msra.mxu0 %v348
      %367 = vmatprep.subr.bf16.mxu0 0
      %368 = vmatpush1.bf16.msra.mxu0 %v349
      %369 = vmatprep.subr.bf16.mxu0 0
      %370 = vmatpush1.bf16.msra.mxu0 %v350
      %371 = vmatprep.subr.bf16.mxu0 0
      %372 = vmatpush1.bf16.msra.mxu0 %v351
      %373 = vmatprep.subr.bf16.mxu0 0
      %374 = vmatpush1.bf16.msra.mxu0 %v352
      %375 = vmatprep.subr.bf16.mxu0 0
      %376 = vmatpush1.bf16.msra.mxu0 %v353
      %377 = vmatprep.subr.bf16.mxu0 0
      %378 = vmatpush1.bf16.msra.mxu0 %v354
      %379 = vmatprep.subr.bf16.mxu0 0
      %380 = vmatpush1.bf16.msra.mxu0 0
      %381 = vmatprep.subr.bf16.mxu0 0
      %382 = vmatpush1.bf16.msra.mxu0 0
      %383 = vmatprep.subr.bf16.mxu0 0
      %384 = vmatpush1.bf16.msra.mxu0 0
      %385 = vmatprep.subr.bf16.mxu0 0
      %386 = vmatpush1.bf16.msra.mxu0 0
      %387 = vmatprep.subr.bf16.mxu0 0
      %388 = vmatpush1.bf16.msra.mxu0 0
      %389 = vmatprep.subr.bf16.mxu0 0
      %390 = vmatpush1.bf16.msra.mxu0 0
      %391 = vmatprep.subr.bf16.mxu0 0
      %392 = vmatpush1.bf16.msra.mxu0 0
      %393 = vmatprep.subr.bf16.mxu0 0
      %394 = vmatpush1.bf16.msra.mxu0 0
      %395 = vmatprep.mubr.bf16.mxu0 0
      %396 = vmatmul.mubr.bf16.gmra.mrb[0].mxu0 %v285
      %v397 = vpop.f32.mrb[0].mxu0
      %v398 = vadd.f32 %v225, %v397
      %v399 = vpop.f32.mrb[0].mxu0
      %v400 = vpop.f32.mrb[0].mxu0
      %v401 = vadd.f32 %v225, %v400
      %v402 = vpop.f32.mrb[0].mxu0
      %403 = vmatprep.mubr.bf16.mxu0 0
      %404 = vmatmul.mubr.bf16.gmra.mrb[0].mxu0 %v286
      %v405 = vpop.f32.mrb[0].mxu0
      %v406 = vadd.f32 %v225, %v405
      %v407 = vpop.f32.mrb[0].mxu0
      %v408 = vpop.f32.mrb[0].mxu0
      %v409 = vadd.f32 %v225, %v408
      %v410 = vpop.f32.mrb[0].mxu0
      %411 = vmatprep.mubr.bf16.mxu0 0
      %412 = vmatmul.mubr.bf16.gmra.mrb[0].mxu0 %v287
      %v413 = vpop.f32.mrb[0].mxu0
      %v414 = vadd.f32 %v225, %v413
      %v415 = vpop.f32.mrb[0].mxu0
      %v416 = vpop.f32.mrb[0].mxu0
      %v417 = vadd.f32 %v225, %v416
      %v418 = vpop.f32.mrb[0].mxu0
      %419 = vmatprep.mubr.bf16.mxu0 0
      %420 = vmatmul.mubr.bf16.gmra.mrb[0].mxu0 %v288
      %v421 = vpop.f32.mrb[0].mxu0
      %v422 = vadd.f32 %v225, %v421
      %v423 = vpop.f32.mrb[0].mxu0
      %v424 = vpop.f32.mrb[0].mxu0
      %v425 = vadd.f32 %v225, %v424
      %v426 = vpop.f32.mrb[0].mxu0
      %427 = vmatprep.mubr.bf16.mxu0 0
      %428 = vmatmul.mubr.bf16.gmra.mrb[0].mxu0 %v289
      %v429 = vpop.f32.mrb[0].mxu0
      %v430 = vadd.f32 %v225, %v429
      %v431 = vpop.f32.mrb[0].mxu0
      %v432 = vpop.f32.mrb[0].mxu0
      %v433 = vadd.f32 %v225, %v432
      %v434 = vpop.f32.mrb[0].mxu0
      %435 = vmatprep.mubr.bf16.mxu0 0
      %436 = vmatmul.mubr.bf16.gmra.mrb[0].mxu0 %v290
      %v437 = vpop.f32.mrb[0].mxu0
      %v438 = vadd.f32 %v225, %v437
      %v439 = vpop.f32.mrb[0].mxu0
      %v440 = vpop.f32.mrb[0].mxu0
      %v441 = vadd.f32 %v225, %v440
      %v442 = vpop.f32.mrb[0].mxu0
      %443 = vmatprep.mubr.bf16.mxu0 0
      %444 = vmatmul.mubr.bf16.gmra.mrb[0].mxu0 %v291
      %v445 = vpop.f32.mrb[0].mxu0
      %v446 = vadd.f32 %v225, %v445
      %v447 = vpop.f32.mrb[0].mxu0
      %v448 = vpop.f32.mrb[0].mxu0
      %v449 = vadd.f32 %v225, %v448
      %v450 = vpop.f32.mrb[0].mxu0
      %451 = vmatprep.mubr.bf16.mxu0 0
      %452 = vmatmul.mubr.bf16.gmra.mrb[0].mxu0 %v292
      %v453 = vpop.f32.mrb[0].mxu0
      %v454 = vadd.f32 %v225, %v453
      %v455 = vpop.f32.mrb[0].mxu0
      %v456 = vpop.f32.mrb[0].mxu0
      %v457 = vadd.f32 %v225, %v456
      %v458 = vpop.f32.mrb[0].mxu0
      %459 = vmatprep.mubr.bf16.mxu0 0
      %460 = vmatmul.mubr.bf16.gmra.mrb[0].mxu0 %v293
      %v461 = vpop.f32.mrb[0].mxu0
      %v462 = vadd.f32 %v225, %v461
      %v463 = vpop.f32.mrb[0].mxu0
      %v464 = vpop.f32.mrb[0].mxu0
      %v465 = vadd.f32 %v225, %v464
      %v466 = vpop.f32.mrb[0].mxu0
      %467 = vmatprep.mubr.bf16.mxu0 0
      %468 = vmatmul.mubr.bf16.gmra.mrb[0].mxu0 %v294
      %v469 = vpop.f32.mrb[0].mxu0
      %v470 = vadd.f32 %v225, %v469
      %v471 = vpop.f32.mrb[0].mxu0
      %v472 = vpop.f32.mrb[0].mxu0
      %v473 = vadd.f32 %v225, %v472
      %v474 = vpop.f32.mrb[0].mxu0
      %475 = vmatprep.mubr.bf16.mxu0 0
      %476 = vmatmul.mubr.bf16.gmra.mrb[0].mxu0 %v295
      %v477 = vpop.f32.mrb[0].mxu0
      %v478 = vadd.f32 %v225, %v477
      %v479 = vpop.f32.mrb[0].mxu0
      %v480 = vpop.f32.mrb[0].mxu0
      %v481 = vadd.f32 %v225, %v480
      %v482 = vpop.f32.mrb[0].mxu0
      %483 = vmatprep.mubr.bf16.mxu0 0
      %484 = vmatmul.mubr.bf16.gmra.mrb[0].mxu0 %v296
      %v485 = vpop.f32.mrb[0].mxu0
      %v486 = vadd.f32 %v225, %v485
      %v487 = vpop.f32.mrb[0].mxu0
      %v488 = vpop.f32.mrb[0].mxu0
      %v489 = vadd.f32 %v225, %v488
      %v490 = vpop.f32.mrb[0].mxu0
      %491 = vmatprep.mubr.bf16.mxu0 0
      %492 = vmatmul.mubr.bf16.gmra.mrb[0].mxu0 %v297
      %v493 = vpop.f32.mrb[0].mxu0
      %v494 = vadd.f32 %v225, %v493
      %v495 = vpop.f32.mrb[0].mxu0
      %v496 = vpop.f32.mrb[0].mxu0
      %v497 = vadd.f32 %v225, %v496
      %v498 = vpop.f32.mrb[0].mxu0
      %499 = vmatprep.mubr.bf16.mxu0 0
      %500 = vmatmul.mubr.bf16.gmra.mrb[0].mxu0 %v298
      %v501 = vpop.f32.mrb[0].mxu0
      %v502 = vadd.f32 %v225, %v501
      %v503 = vpop.f32.mrb[0].mxu0
      %v504 = vpop.f32.mrb[0].mxu0
      %v505 = vadd.f32 %v225, %v504
      %v506 = vpop.f32.mrb[0].mxu0
      %507 = vmatprep.mubr.bf16.mxu0 0
      %508 = vmatmul.mubr.bf16.gmra.mrb[0].mxu0 %v299
      %v509 = vpop.f32.mrb[0].mxu0
      %v510 = vadd.f32 %v225, %v509
      %v511 = vpop.f32.mrb[0].mxu0
      %v512 = vpop.f32.mrb[0].mxu0
      %v513 = vpop.f32.mrb[0].mxu0
      %514 = vdwg.mxu0
      %vm515 = vcmask 130048
      %516 = vst.msk [vmem:[%s172] sm:$0xff] %vm515, %v398
      %517 = vst.msk [vmem:[%s172 + $0x8] sm:$0xff] %vm515, %v401
      %518 = vst.msk [vmem:[%s172 + $0x10] sm:$0xff] %vm515, %v406
      %519 = vst.msk [vmem:[%s172 + $0x18] sm:$0xff] %vm515, %v409
      %520 = vst.msk [vmem:[%s172 + $0x20] sm:$0xff] %vm515, %v414
      %521 = vst.msk [vmem:[%s172 + $0x28] sm:$0xff] %vm515, %v417
      %522 = vst.msk [vmem:[%s172 + $0x30] sm:$0xff] %vm515, %v422
      %523 = vst.msk [vmem:[%s172 + $0x38] sm:$0xff] %vm515, %v425
      %524 = vst.msk [vmem:[%s172 + $0x40] sm:$0xff] %vm515, %v430
      %525 = vst.msk [vmem:[%s172 + $0x48] sm:$0xff] %vm515, %v433
      %526 = vst.msk [vmem:[%s172 + $0x50] sm:$0xff] %vm515, %v438
      %527 = vst.msk [vmem:[%s172 + $0x58] sm:$0xff] %vm515, %v441
      %528 = vst.msk [vmem:[%s172 + $0x60] sm:$0xff] %vm515, %v446
      %529 = vst.msk [vmem:[%s172 + $0x68] sm:$0xff] %vm515, %v449
      %530 = vst.msk [vmem:[%s172 + $0x70] sm:$0xff] %vm515, %v454
      %531 = vst.msk [vmem:[%s172 + $0x78] sm:$0xff] %vm515, %v457
      %532 = vst.msk [vmem:[%s172 + $0x80] sm:$0xff] %vm515, %v462
      %533 = vst.msk [vmem:[%s172 + $0x88] sm:$0xff] %vm515, %v465
      %534 = vst.msk [vmem:[%s172 + $0x90] sm:$0xff] %vm515, %v470
      %535 = vst.msk [vmem:[%s172 + $0x98] sm:$0xff] %vm515, %v473
      %536 = vst.msk [vmem:[%s172 + $0xa0] sm:$0xff] %vm515, %v478
      %537 = vst.msk [vmem:[%s172 + $0xa8] sm:$0xff] %vm515, %v481
      %538 = vst.msk [vmem:[%s172 + $0xb0] sm:$0xff] %vm515, %v486
      %539 = vst.msk [vmem:[%s172 + $0xb8] sm:$0xff] %vm515, %v489
      %540 = vst.msk [vmem:[%s172 + $0xc0] sm:$0xff] %vm515, %v494
      %541 = vst.msk [vmem:[%s172 + $0xc8] sm:$0xff] %vm515, %v497
      %542 = vst.msk [vmem:[%s172 + $0xd0] sm:$0xff] %vm515, %v502
      %543 = vst.msk [vmem:[%s172 + $0xd8] sm:$0xff] %vm515, %v505
      %544 = vst.msk [vmem:[%s172 + $0xe0] sm:$0xff] %vm515, %v510
      %s545 = smul.u32 29, %s14
      %p546 = scmp.lt.s32.totalorder %s545, 57
      %s547 = scalar_select %p546, %s545, 57
      %s548 = smul.addr %s547, 8
      %s549 = scalar_lea.vmem %s3, %s548
      // Predicated region
      $region33: #{decoder_forward.5} parent=31 // pred_check
        %p550 = pneg %p100
      $region34: #{decoder_forward.5} parent=31 // pred_check_branch
        %552 = sbr.rel (%p550) target = $region36
      $region35: #{decoder_forward.5} parent=31 // pred_region
        %s553 = smul.u32 29, %s14
      $region36: #{decoder_forward.5} parent=31 // pred_fallthru
        _
    $region32: #{decoder_forward.5} parent=5 // pred_fallthru
      _
    %p554 = scmp.le.s32.totalorder 2, %s9
    // Predicated region
    $region37: #{decoder_forward.5} parent=5 // pred_check
      %p555 = pneg %p554
    $region38: #{decoder_forward.5} parent=5 // pred_check_branch
      %557 = sbr.rel (%p555) target = $region40
    $region39: #{decoder_forward.5} parent=5 // pred_region
      %s558 = ssub.s32 %s9, 2
      // Predicated region
      $region41: #{decoder_forward.5} parent=39 // pred_check
        %p559 = pneg %p106
      $region42: #{decoder_forward.5} parent=39 // pred_check_branch
        %561 = sbr.rel (%p559) target = $region44
      $region43: #{decoder_forward.5} parent=39 // pred_region
        %s562 = smul.u32 29, %s15
        %p563 = scmp.lt.s32.totalorder %s562, 57
        %s564 = scalar_select %p563, %s562, 57
        %s565 = smul.addr %s564, 8
        %s566 = scalar_lea.vmem %s3, %s565
      $region44: #{decoder_forward.5} parent=39 // pred_fallthru
        _
    $region40: #{decoder_forward.5} parent=5 // pred_fallthru
      _
  $region6: #{decoder_forward.5} parent=0 // loop_footer
    %s13 = sadd.s32 1, %s9
  $region7: #{decoder_forward.5} parent=0 // loop_footer_branch
    %8 = sbr.rel target = $region3
  $region8: #{decoder_forward.5} parent=0 // loop_exit
    _

</llo_original>
